<compile_context>
chip_gen: v7x
topology: tpu7x:2x2x1
jax: 0.10.0
libtpu: 0.0.40
codegen_flags: <defaults>
</compile_context>

<pallas_src>
import functools

import jax
import jax.numpy as jnp
from jax.experimental import pallas as pl
from jax.experimental.pallas import tpu as pltpu

FEAT_DIM = 512      # latent dim of the (ResNet-18-like) extractor in the module
TILE_B_MAX = 512    # upper bound on the batch tile (per review: 256-512)
EPS = 1e-12         # guards d2 == 0 (latent exactly on a center)


def _round_up(n, m):
    return ((n + m - 1) // m) * m


def _clustering_kernel(x_ref, wf_ref, bf_ref, cent_ref, c2_ref, u_ref, *,
                       power, class_number):
    # ---- feat_extractor stand-in: linear + ReLU (bf16 MXU, f32 accumulate) ----
    # TODO(synk): the real feat_extractor is an injected external nn.Module
    # (ResNet-18 backbone); it is replaced by a deterministic linear+ReLU here.
    x_bf = x_ref[...].astype(jnp.bfloat16)               # in-kernel cast, no pre-pass
    latent = jnp.dot(x_bf, wf_ref[...],
                     preferred_element_type=jnp.float32)  # (TB, 512) f32
    latent = jnp.maximum(latent + bf_ref[...], 0.0)

    # ---- squared Euclidean distance to every (padded) cluster center ----
    # ||a - b||^2 = |a|^2 - 2 a.b + |b|^2 ; |b|^2 (c2) precomputed in the wrapper.
    # x2 uses the bf16-round-tripped latent so the cancellation is consistent
    # with the bf16 operand fed to the MXU.
    lat_bf = latent.astype(jnp.bfloat16)
    lat_rt = lat_bf.astype(jnp.float32)
    xc = jnp.dot(lat_bf, cent_ref[...],
                 preferred_element_type=jnp.float32)      # (TB, CPAD)
    x2 = jnp.sum(lat_rt * lat_rt, axis=1, keepdims=True)  # (TB, 1)
    d2 = jnp.maximum(x2 - 2.0 * xc + c2_ref[...], 0.0) + EPS

    # mask for the padded cluster columns
    col = jax.lax.broadcasted_iota(jnp.int32, d2.shape, 1)
    valid = col < class_number

    # dis ** power with dis = sqrt(d2)  ==>  d2 ** (power/2); sqrt eliminated.
    half_power = 0.5 * power
    if half_power == -1.0:
        # fuzzifier == 2.0 fast path: one approx reciprocal on the EUP slot
        dis = jnp.where(valid, pl.reciprocal(d2, approx=True), 0.0)
    else:
        # general case, overflow-safe: log-space with per-row max subtraction
        logd = half_power * jnp.log(d2)
        logd = jnp.where(valid, logd, jnp.float32(-1e30))
        row_max = jnp.max(logd, axis=1, keepdims=True)
        dis = jnp.exp(logd - row_max)                     # pad columns -> 0

    # u[b,c] = dis[b,c] / sum_c' dis[b,c']  (exact divide: rows sum to 1)
    denom = jnp.sum(dis, axis=1, keepdims=True)           # (TB, 1)
    u_ref[...] = dis / denom


def clustering_model_forward(x_nchw, w_feat, b_feat, clustering_layer, fuzzifier):
    """Forward pass of clustering_model. Returns u_matrix of shape (B, class_number)."""
    B = x_nchw.shape[0]
    feat_dim = w_feat.shape[1]
    class_number = clustering_layer.shape[1]
    power = -2.0 / (float(fuzzifier) - 1.0)              # static hyperparameter

    # x stays in its producer dtype (f32); reshape is free for contiguous NCHW.
    x_flat = x_nchw.reshape(B, -1)
    din = x_flat.shape[1]

    # batch tile: big enough to amortize per-step overhead, >= 2 grid steps when
    # B allows it (megacore on v7x), sublane(8)-aligned, VMEM-capped.  Pallas
    # masks the partial tail block, so no batch padding pass is needed.
    vmem_cap_rows = max(8, ((8 * 1024 * 1024) // (din * 4)) // 8 * 8)
    tile_b = max(8, min(TILE_B_MAX, vmem_cap_rows, _round_up(pl.cdiv(B, 2), 8)))
    grid_b = pl.cdiv(B, tile_b)

    # cluster axis padded to a lane-dense multiple of 128 (kept at 128 for
    # class_number <= 128 -- do NOT widen to 256, see review).
    cpad = max(128, _round_up(class_number, 128))

    cent_bf = clustering_layer.astype(jnp.bfloat16)
    cent_rt = cent_bf.astype(jnp.float32)
    # hoisted weight-only constant: per-center squared norm (bf16-consistent)
    c2 = jnp.sum(cent_rt * cent_rt, axis=0, keepdims=True)        # (1, C)
    c2 = jnp.pad(c2, ((0, 0), (0, cpad - class_number)))
    centers = jnp.pad(cent_bf, ((0, 0), (0, cpad - class_number)))

    wf = w_feat.astype(jnp.bfloat16)
    bf = b_feat.reshape(1, feat_dim).astype(jnp.float32)

    kernel = functools.partial(_clustering_kernel, power=power,
                               class_number=class_number)

    u_padded = pl.pallas_call(
        kernel,
        out_shape=jax.ShapeDtypeStruct((B, cpad), jnp.float32),
        grid=(grid_b,),
        in_specs=[
            pl.BlockSpec((tile_b, din), lambda i: (i, 0)),       # x tile (streamed)
            pl.BlockSpec((din, feat_dim), lambda i: (0, 0)),     # w_feat (resident)
            pl.BlockSpec((1, feat_dim), lambda i: (0, 0)),       # bias   (resident)
            pl.BlockSpec((feat_dim, cpad), lambda i: (0, 0)),    # centers (resident)
            pl.BlockSpec((1, cpad), lambda i: (0, 0)),           # |center|^2 (resident)
        ],
        out_specs=pl.BlockSpec((tile_b, cpad), lambda i: (i, 0)),
        compiler_params=pltpu.CompilerParams(
            dimension_semantics=("parallel",),                   # megacore on v7x
            vmem_limit_bytes=48 * 1024 * 1024,                   # headroom for 512-row f32 x tiles
        ),
    )(x_flat, wf, bf, centers, c2)

    return u_padded[:, :class_number]


if __name__ == "__main__":
    key = jax.random.PRNGKey(0)
    B, Cin, H, W = 2, 3, 16, 16          # small CIFAR-like input
    class_number = 10

    k1, k2, k3, k4 = jax.random.split(key, 4)
    x = jax.random.normal(k1, (B, Cin, H, W), dtype=jnp.float32)

    din = Cin * H * W
    # deterministic synthetic parameters (no checkpoint load)
    w_feat = 0.05 * jax.random.normal(k2, (din, FEAT_DIM), dtype=jnp.float32)
    b_feat = 0.05 * jax.random.normal(k3, (1, FEAT_DIM), dtype=jnp.float32)
    clustering_layer = jax.random.normal(k4, (FEAT_DIM, class_number), dtype=jnp.float32)

    def reference(fuzzifier):
        latent = jnp.maximum(x.reshape(B, -1) @ w_feat + b_feat, 0.0)
        d = jnp.sqrt(jnp.sum(
            (latent[:, None, :] - clustering_layer.T[None, :, :]) ** 2, axis=2))
        d = d ** (-2.0 / (fuzzifier - 1.0))
        return d / jnp.sum(d, axis=1, keepdims=True)

    # exercise both the fuzzifier==2 reciprocal fast path and the stable
    # log-space general path
    for fuzzifier in (2.0, 1.5):
        u = clustering_model_forward(x, w_feat, b_feat, clustering_layer, fuzzifier)
        u = jax.block_until_ready(u)
        u_ref = reference(fuzzifier)

        assert u.shape == (B, class_number)
        # exact normalization -> tight sum-to-one check
        assert jnp.allclose(jnp.sum(u, axis=1), 1.0, atol=1e-5)
        # bf16 MXU operands + approx reciprocal on d2 -> loose elementwise check
        assert jnp.allclose(u, u_ref, atol=1e-2, rtol=1e-2)

    print("KERNEL_OK")
</pallas_src>

<mosaic_0001>
module attributes {stable_mosaic.version = 11 : i64} {
  func.func @_clustering_kernel(%arg0: i32, %arg1: memref<8x768xf32, #tpu.memory_space<vmem>>, %arg2: memref<768x512xbf16, #tpu.memory_space<vmem>>, %arg3: memref<1x512xf32, #tpu.memory_space<vmem>>, %arg4: memref<512x128xbf16, #tpu.memory_space<vmem>>, %arg5: memref<1x128xf32, #tpu.memory_space<vmem>>, %arg6: memref<8x128xf32, #tpu.memory_space<vmem>>) attributes {dimension_semantics = [#tpu.dimension_semantics<parallel>], iteration_bounds = array<i64: 1>, scalar_prefetch = 0 : i64, scratch_operands = 0 : i64, tpu.core_type = #tpu.core_type<tc>, window_params = [{transform_indices = @transform_0, window_bounds = array<i64: 8, 768>}, {pipeline_mode = #tpu.pipeline_mode<synchronous>, transform_indices = @transform_1, window_bounds = array<i64: 768, 512>}, {pipeline_mode = #tpu.pipeline_mode<synchronous>, transform_indices = @transform_2, window_bounds = array<i64: 1, 512>}, {pipeline_mode = #tpu.pipeline_mode<synchronous>, transform_indices = @transform_3, window_bounds = array<i64: 512, 128>}, {pipeline_mode = #tpu.pipeline_mode<synchronous>, transform_indices = @transform_4, window_bounds = array<i64: 1, 128>}, {transform_indices = @transform_5, window_bounds = array<i64: 8, 128>}]} {
    %c0 = arith.constant 0 : index
    %c0_0 = arith.constant 0 : index
    %0 = vector.load %arg1[%c0, %c0_0] : memref<8x768xf32, #tpu.memory_space<vmem>>, vector<8x768xf32>
    %1 = arith.truncf %0 : vector<8x768xf32> to vector<8x768xbf16>
    %c0_1 = arith.constant 0 : index
    %c0_2 = arith.constant 0 : index
    %2 = vector.load %arg2[%c0_1, %c0_2] : memref<768x512xbf16, #tpu.memory_space<vmem>>, vector<768x512xbf16>
    %cst = arith.constant dense<0.000000e+00> : vector<8x512xf32>
    %3 = tpu.matmul %1, %2, %cst {dimension_numbers = #tpu.dot_dimension_numbers<[1], [0], [0], [1], [0, 0, 1, 1], [], []>} : vector<8x768xbf16>, vector<768x512xbf16>, vector<8x512xf32> -> vector<8x512xf32>
    %c0_3 = arith.constant 0 : index
    %c0_4 = arith.constant 0 : index
    %4 = vector.load %arg3[%c0_3, %c0_4] : memref<1x512xf32, #tpu.memory_space<vmem>>, vector<1x512xf32>
    %5 = vector.broadcast %4 : vector<1x512xf32> to vector<8x512xf32>
    %6 = arith.addf %3, %5 : vector<8x512xf32>
    %cst_5 = arith.constant 0.000000e+00 : f32
    %7 = vector.broadcast %cst_5 : f32 to vector<8x512xf32>
    %8 = arith.maximumf %6, %7 : vector<8x512xf32>
    %9 = arith.truncf %8 : vector<8x512xf32> to vector<8x512xbf16>
    %10 = arith.extf %9 : vector<8x512xbf16> to vector<8x512xf32>
    %c0_6 = arith.constant 0 : index
    %c0_7 = arith.constant 0 : index
    %11 = vector.load %arg4[%c0_6, %c0_7] : memref<512x128xbf16, #tpu.memory_space<vmem>>, vector<512x128xbf16>
    %cst_8 = arith.constant dense<0.000000e+00> : vector<8x128xf32>
    %12 = tpu.matmul %9, %11, %cst_8 {dimension_numbers = #tpu.dot_dimension_numbers<[1], [0], [0], [1], [0, 0, 1, 1], [], []>} : vector<8x512xbf16>, vector<512x128xbf16>, vector<8x128xf32> -> vector<8x128xf32>
    %13 = arith.mulf %10, %10 : vector<8x512xf32>
    %cst_9 = arith.constant dense<0.000000e+00> : vector<8xf32>
    %14 = vector.multi_reduction <add>, %13, %cst_9 [1] : vector<8x512xf32> to vector<8xf32>
    %15 = vector.shape_cast %14 : vector<8xf32> to vector<8x1xf32>
    %cst_10 = arith.constant 2.000000e+00 : f32
    %16 = vector.broadcast %cst_10 : f32 to vector<8x128xf32>
    %17 = arith.mulf %16, %12 : vector<8x128xf32>
    %18 = vector.broadcast %15 : vector<8x1xf32> to vector<8x128xf32>
    %19 = arith.subf %18, %17 : vector<8x128xf32>
    %c0_11 = arith.constant 0 : index
    %c0_12 = arith.constant 0 : index
    %20 = vector.load %arg5[%c0_11, %c0_12] : memref<1x128xf32, #tpu.memory_space<vmem>>, vector<1x128xf32>
    %21 = vector.broadcast %20 : vector<1x128xf32> to vector<8x128xf32>
    %22 = arith.addf %19, %21 : vector<8x128xf32>
    %cst_13 = arith.constant 0.000000e+00 : f32
    %23 = vector.broadcast %cst_13 : f32 to vector<8x128xf32>
    %24 = arith.maximumf %22, %23 : vector<8x128xf32>
    %cst_14 = arith.constant 9.99999996E-13 : f32
    %25 = vector.broadcast %cst_14 : f32 to vector<8x128xf32>
    %26 = arith.addf %24, %25 : vector<8x128xf32>
    %27 = tpu.iota {dimensions = array<i32: 1>} : vector<8x128xi32>
    %c10_i32 = arith.constant 10 : i32
    %28 = vector.broadcast %c10_i32 : i32 to vector<8x128xi32>
    %29 = arith.cmpi slt, %27, %28 : vector<8x128xi32>
    %30 = tpu.reciprocal %26 {approx = true} : vector<8x128xf32> -> vector<8x128xf32>
    %cst_15 = arith.constant 0.000000e+00 : f32
    %31 = vector.broadcast %cst_15 : f32 to vector<8x128xf32>
    %32 = arith.select %29, %30, %31 : vector<8x128xi1>, vector<8x128xf32>
    %cst_16 = arith.constant dense<0.000000e+00> : vector<8xf32>
    %33 = vector.multi_reduction <add>, %32, %cst_16 [1] : vector<8x128xf32> to vector<8xf32>
    %34 = vector.shape_cast %33 : vector<8xf32> to vector<8x1xf32>
    %35 = vector.broadcast %34 : vector<8x1xf32> to vector<8x128xf32>
    %36 = arith.divf %32, %35 : vector<8x128xf32>
    %c0_17 = arith.constant 0 : index
    %c0_18 = arith.constant 0 : index
    %37 = vector.load %arg6[%c0_17, %c0_18] : memref<8x128xf32, #tpu.memory_space<vmem>>, vector<8x128xf32>
    tpu.vector_store %arg6[%c0_17, %c0_18], %36 {strides = array<i32>} : memref<8x128xf32, #tpu.memory_space<vmem>>, vector<8x128xf32>,
    return
  }
  func.func @transform_0(%arg0: i32) -> (i32, i32) {
    %c0_i32 = arith.constant 0 : i32
    %c0_i32_0 = arith.constant 0 : i32
    return %arg0, %c0_i32 : i32, i32
  }
  func.func @transform_1(%arg0: i32) -> (i32, i32) {
    %c0_i32 = arith.constant 0 : i32
    %c0_i32_0 = arith.constant 0 : i32
    %c0_i32_1 = arith.constant 0 : i32
    return %c0_i32, %c0_i32_0 : i32, i32
  }
  func.func @transform_2(%arg0: i32) -> (i32, i32) {
    %c0_i32 = arith.constant 0 : i32
    %c0_i32_0 = arith.constant 0 : i32
    %c0_i32_1 = arith.constant 0 : i32
    return %c0_i32, %c0_i32_0 : i32, i32
  }
  func.func @transform_3(%arg0: i32) -> (i32, i32) {
    %c0_i32 = arith.constant 0 : i32
    %c0_i32_0 = arith.constant 0 : i32
    %c0_i32_1 = arith.constant 0 : i32
    return %c0_i32, %c0_i32_0 : i32, i32
  }
  func.func @transform_4(%arg0: i32) -> (i32, i32) {
    %c0_i32 = arith.constant 0 : i32
    %c0_i32_0 = arith.constant 0 : i32
    %c0_i32_1 = arith.constant 0 : i32
    return %c0_i32, %c0_i32_0 : i32, i32
  }
  func.func @transform_5(%arg0: i32) -> (i32, i32) {
    %c0_i32 = arith.constant 0 : i32
    %c0_i32_0 = arith.constant 0 : i32
    return %arg0, %c0_i32 : i32, i32
  }
}

</mosaic_0001>

<llo_original>
// kernel: tpu_custom_call.1
$region0: #{tpu_custom_call.1}
  #allocation0 [shape = 'u32[]', space=smem, size = 0x4, offset = 0x4, fixed_abs, tag = 'smem constant byte address 0x4 - core index']
  #allocation1 [shape = 'u32[144,128]{1,0:T(1,128)}', space=vmem, size = 0x12000, scoped, tag = 'internal scratch']
  %s0 = inlined_call_operand.hbm [shape: f32[2,768], index: 0, kind: input, shape index: {}]
  %s1 = inlined_call_operand.hbm [shape: bf16[768,512], index: 1, kind: input, shape index: {}]
  %s2 = inlined_call_operand.vmem [shape: f32[1,512], index: 2, kind: input, shape index: {}]
  %s3 = inlined_call_operand.hbm [shape: bf16[512,128], index: 3, kind: input, shape index: {}]
  %s4 = inlined_call_operand.vmem [shape: f32[1,128], index: 4, kind: input, shape index: {}]
  %s5 = inlined_call_operand.hbm [shape: f32[2,128], index: 5, kind: output, shape index: {}]
  %s6 = sld [smem:[#allocation0]]
  $region42: #{tpu_custom_call.1} parent=0
    _
  %s8 = ssub.s32 1, %s6
  %s9 = scalar_select 0, %s8, %s6
  $region1: #{tpu_custom_call.1} parent=0
    #allocation2 [shape = 'u8[24576]{0}', space=vmem, size = 0x6000, scoped, tag = 'input window, operand 0, single buffered']
    #allocation3 [shape = 's32[1]{0}', space=sflag, size = 0x4, scoped, tag = 'scoped memory for tpu_custom_call.1']
    #allocation4 [shape = 's32[1]{0}', space=sflag, size = 0x4, scoped, tag = 'scoped memory for tpu_custom_call.1']
    #allocation5 [shape = 'u8[786432]{0}', space=vmem, size = 0xc0000, scoped, tag = 'input window, operand 1, single buffered']
    #allocation6 [shape = 's32[1]{0}', space=sflag, size = 0x4, scoped, tag = 'scoped memory for tpu_custom_call.1']
    #allocation7 [shape = 'u8[131072]{0}', space=vmem, size = 0x20000, scoped, tag = 'input window, operand 3, single buffered']
    #allocation8 [shape = 'u8[4096]{0}', space=vmem, size = 0x1000, scoped, tag = 'output window, operand 0, single buffered']
    %10 = vsyncpa [#allocation3], 0
    %11 = vsyncpa [#allocation6], 0
    %12 = vsyncpa [#allocation4], 0
    // Predicated region
    $region2: #{tpu_custom_call.1} parent=1 // pred_check
      _
    $region3: #{tpu_custom_call.1} parent=1 // pred_check_branch
      %14 = sbr.rel (0) target = $region5
    $region4: #{tpu_custom_call.1} parent=1 // pred_region
      %s16 = ssub.s32 768, 192
      %17 = vsyncadd [#allocation3], %s16
      %s18 = sshll.u32 [#allocation2], 4
      %s19 = int_to_ptr.vmem [resolvable:$true] %s18
      %24 = dma.hbm_to_vmem [thread:$0]  %s0, 192, %s19, [#allocation3], 192, 192, 12
    $region5: #{tpu_custom_call.1} parent=1 // pred_fallthru
      _
    // Predicated region
    $region6: #{tpu_custom_call.1} parent=1 // pred_check
      _
    $region7: #{tpu_custom_call.1} parent=1 // pred_check_branch
      %26 = sbr.rel (0) target = $region9
    $region8: #{tpu_custom_call.1} parent=1 // pred_region
      %s28 = ssub.s32 24576, 24576
      %29 = vsyncadd [#allocation6], %s28
      %s30 = sshll.u32 [#allocation5], 4
      %s31 = int_to_ptr.vmem [resolvable:$true] %s30
      %36 = dma.hbm_to_vmem [thread:$0]  %s1, 24576, %s31, [#allocation6], 256, 256, 16
    $region9: #{tpu_custom_call.1} parent=1 // pred_fallthru
      _
    // Predicated region
    $region10: #{tpu_custom_call.1} parent=1 // pred_check
      _
    $region11: #{tpu_custom_call.1} parent=1 // pred_check_branch
      %38 = sbr.rel (0) target = $region13
    $region12: #{tpu_custom_call.1} parent=1 // pred_region
      _
    $region13: #{tpu_custom_call.1} parent=1 // pred_fallthru
      _
    // Predicated region
    $region14: #{tpu_custom_call.1} parent=1 // pred_check
      _
    $region15: #{tpu_custom_call.1} parent=1 // pred_check_branch
      %40 = sbr.rel (0) target = $region17
    $region16: #{tpu_custom_call.1} parent=1 // pred_region
      %s42 = ssub.s32 4096, 4096
      %43 = vsyncadd [#allocation6], %s42
      %s44 = sshll.u32 [#allocation7], 4
      %s45 = int_to_ptr.vmem [resolvable:$true] %s44
      %50 = dma.hbm_to_vmem [thread:$0]  %s3, 4096, %s45, [#allocation6], 64, 64, 4
    $region17: #{tpu_custom_call.1} parent=1 // pred_fallthru
      _
    // Predicated region
    $region18: #{tpu_custom_call.1} parent=1 // pred_check
      _
    $region19: #{tpu_custom_call.1} parent=1 // pred_check_branch
      %52 = sbr.rel (0) target = $region21
    $region20: #{tpu_custom_call.1} parent=1 // pred_region
      _
    $region21: #{tpu_custom_call.1} parent=1 // pred_fallthru
      _
    // Predicated region
    $region22: #{tpu_custom_call.1} parent=1 // pred_check
      _
    $region23: #{tpu_custom_call.1} parent=1 // pred_check_branch
      %54 = sbr.rel (0) target = $region25
    $region24: #{tpu_custom_call.1} parent=1 // pred_region
      %55 = dma.done [#allocation3], 768
    $region25: #{tpu_custom_call.1} parent=1 // pred_fallthru
      _
    // Predicated region
    $region26: #{tpu_custom_call.1} parent=1 // pred_check
      _
    $region27: #{tpu_custom_call.1} parent=1 // pred_check_branch
      %57 = sbr.rel (0) target = $region29
    $region28: #{tpu_custom_call.1} parent=1 // pred_region
      %58 = dma.done [#allocation6], 24576
    $region29: #{tpu_custom_call.1} parent=1 // pred_fallthru
      _
    // Predicated region
    $region30: #{tpu_custom_call.1} parent=1 // pred_check
      _
    $region31: #{tpu_custom_call.1} parent=1 // pred_check_branch
      %60 = sbr.rel (0) target = $region33
    $region32: #{tpu_custom_call.1} parent=1 // pred_region
      %61 = dma.done [#allocation6], 4096
    $region33: #{tpu_custom_call.1} parent=1 // pred_fallthru
      _
    %v63 = vld [vmem:[#allocation2] sm:$0xff]
    %v64 = vld [vmem:[#allocation2 + $0x8] sm:$0xf]
    %v65 = vld [vmem:[#allocation2 + $0xc] sm:$0xff]
    %v66 = vld [vmem:[#allocation2 + $0x14] sm:$0xf]
    %v67 = vld [vmem:[#allocation2 + $0x18] sm:$0xff]
    %v68 = vld [vmem:[#allocation2 + $0x20] sm:$0xf]
    %v69 = vld [vmem:[#allocation2 + $0x24] sm:$0xff]
    %v70 = vld [vmem:[#allocation2 + $0x2c] sm:$0xf]
    %v79 = vcombine.low %v63, %v65
    %v80 = vcombine.high %v63, %v65
    %v81 = vcombine.low %v67, %v69
    %v82 = vcombine.high %v67, %v69
    %v84 = vunpack.c.l.s4 1983009808
    %v85 = vunpack.c.0.s8 %v84
    %v86 = vlaneseq
    %v87 = vshrl.u32 %v86, 7
    %v88 = vsub.s32 %v85, %v87
    %v89 = vrot.slane %v79, %v88
    %v91 = vunpack.c.l.s4 1983009808
    %v92 = vunpack.c.0.s8 %v91
    %v93 = vlaneseq
    %v94 = vshrl.u32 %v93, 7
    %v95 = vsub.s32 %v92, %v94
    %v96 = vrot.slane %v80, %v95
    %v98 = vunpack.c.l.s4 1983009808
    %v99 = vunpack.c.0.s8 %v98
    %v100 = vlaneseq
    %v101 = vshrl.u32 %v100, 7
    %v102 = vsub.s32 %v99, %v101
    %v103 = vrot.slane %v81, %v102
    %v105 = vunpack.c.l.s4 1983009808
    %v106 = vunpack.c.0.s8 %v105
    %v107 = vlaneseq
    %v108 = vshrl.u32 %v107, 7
    %v109 = vsub.s32 %v106, %v108
    %v110 = vrot.slane %v82, %v109
    %v111 = vcombine.low %v89, %v103
    %v112 = vcombine.high %v89, %v103
    %v113 = vcombine.low %v96, %v110
    %v114 = vcombine.high %v96, %v110
    %v115 = vcombine.low %v64, %v66
    %v116 = vcombine.low %v68, %v70
    %v118 = vunpack.c.l.s4 1983009808
    %v119 = vunpack.c.0.s8 %v118
    %v120 = vlaneseq
    %v121 = vshrl.u32 %v120, 7
    %v122 = vsub.s32 %v119, %v121
    %v123 = vrot.slane %v115, %v122
    %v125 = vunpack.c.l.s4 1983009808
    %v126 = vunpack.c.0.s8 %v125
    %v127 = vlaneseq
    %v128 = vshrl.u32 %v127, 7
    %v129 = vsub.s32 %v126, %v128
    %v130 = vrot.slane %v116, %v129
    %v131 = vcombine.low %v123, %v130
    %v132 = vcombine.high %v123, %v130
    %v139 = vpack.c.bf16 %v111, %v111
    %v140 = vpack.c.bf16 %v112, %v112
    %v141 = vpack.c.bf16 %v113, %v113
    %v142 = vpack.c.bf16 %v114, %v114
    %v143 = vpack.c.bf16 %v131, %v131
    %v144 = vpack.c.bf16 %v132, %v132
    %v145 = vld [vmem:[#allocation5] sm:$0xff]
    %v146 = vld [vmem:[#allocation5 + $0x8] sm:$0xff]
    %v147 = vld [vmem:[#allocation5 + $0x10] sm:$0xff]
    %v148 = vld [vmem:[#allocation5 + $0x18] sm:$0xff]
    %v149 = vld [vmem:[#allocation5 + $0x20] sm:$0xff]
    %v150 = vld [vmem:[#allocation5 + $0x28] sm:$0xff]
    %v151 = vld [vmem:[#allocation5 + $0x30] sm:$0xff]
    %v152 = vld [vmem:[#allocation5 + $0x38] sm:$0xff]
    %v153 = vld [vmem:[#allocation5 + $0x40] sm:$0xff]
    %v154 = vld [vmem:[#allocation5 + $0x48] sm:$0xff]
    %v155 = vld [vmem:[#allocation5 + $0x50] sm:$0xff]
    %v156 = vld [vmem:[#allocation5 + $0x58] sm:$0xff]
    %v157 = vld [vmem:[#allocation5 + $0x60] sm:$0xff]
    %v158 = vld [vmem:[#allocation5 + $0x68] sm:$0xff]
    %v159 = vld [vmem:[#allocation5 + $0x70] sm:$0xff]
    %v160 = vld [vmem:[#allocation5 + $0x78] sm:$0xff]
    %v161 = vld [vmem:[#allocation5 + $0x80] sm:$0xff]
    %v162 = vld [vmem:[#allocation5 + $0x88] sm:$0xff]
    %v163 = vld [vmem:[#allocation5 + $0x90] sm:$0xff]
    %v164 = vld [vmem:[#allocation5 + $0x98] sm:$0xff]
    %v165 = vld [vmem:[#allocation5 + $0xa0] sm:$0xff]
    %v166 = vld [vmem:[#allocation5 + $0xa8] sm:$0xff]
    %v167 = vld [vmem:[#allocation5 + $0xb0] sm:$0xff]
    %v168 = vld [vmem:[#allocation5 + $0xb8] sm:$0xff]
    %v169 = vld [vmem:[#allocation5 + $0xc0] sm:$0xff]
    %v170 = vld [vmem:[#allocation5 + $0xc8] sm:$0xff]
    %v171 = vld [vmem:[#allocation5 + $0xd0] sm:$0xff]
    %v172 = vld [vmem:[#allocation5 + $0xd8] sm:$0xff]
    %v173 = vld [vmem:[#allocation5 + $0xe0] sm:$0xff]
    %v174 = vld [vmem:[#allocation5 + $0xe8] sm:$0xff]
    %v175 = vld [vmem:[#allocation5 + $0xf0] sm:$0xff]
    %v176 = vld [vmem:[#allocation5 + $0xf8] sm:$0xff]
    %v177 = vld [vmem:[#allocation5 + $0x100] sm:$0xff]
    %v178 = vld [vmem:[#allocation5 + $0x108] sm:$0xff]
    %v179 = vld [vmem:[#allocation5 + $0x110] sm:$0xff]
    %v180 = vld [vmem:[#allocation5 + $0x118] sm:$0xff]
    %v181 = vld [vmem:[#allocation5 + $0x120] sm:$0xff]
    %v182 = vld [vmem:[#allocation5 + $0x128] sm:$0xff]
    %v183 = vld [vmem:[#allocation5 + $0x130] sm:$0xff]
    %v184 = vld [vmem:[#allocation5 + $0x138] sm:$0xff]
    %v185 = vld [vmem:[#allocation5 + $0x140] sm:$0xff]
    %v186 = vld [vmem:[#allocation5 + $0x148] sm:$0xff]
    %v187 = vld [vmem:[#allocation5 + $0x150] sm:$0xff]
    %v188 = vld [vmem:[#allocation5 + $0x158] sm:$0xff]
    %v189 = vld [vmem:[#allocation5 + $0x160] sm:$0xff]
    %v190 = vld [vmem:[#allocation5 + $0x168] sm:$0xff]
    %v191 = vld [vmem:[#allocation5 + $0x170] sm:$0xff]
    %v192 = vld [vmem:[#allocation5 + $0x178] sm:$0xff]
    %v193 = vld [vmem:[#allocation5 + $0x180] sm:$0xff]
    %v194 = vld [vmem:[#allocation5 + $0x188] sm:$0xff]
    %v195 = vld [vmem:[#allocation5 + $0x190] sm:$0xff]
    %v196 = vld [vmem:[#allocation5 + $0x198] sm:$0xff]
    %v197 = vld [vmem:[#allocation5 + $0x1a0] sm:$0xff]
    %v198 = vld [vmem:[#allocation5 + $0x1a8] sm:$0xff]
    %v199 = vld [vmem:[#allocation5 + $0x1b0] sm:$0xff]
    %v200 = vld [vmem:[#allocation5 + $0x1b8] sm:$0xff]
    %v201 = vld [vmem:[#allocation5 + $0x1c0] sm:$0xff]
    %v202 = vld [vmem:[#allocation5 + $0x1c8] sm:$0xff]
    %v203 = vld [vmem:[#allocation5 + $0x1d0] sm:$0xff]
    %v204 = vld [vmem:[#allocation5 + $0x1d8] sm:$0xff]
    %v205 = vld [vmem:[#allocation5 + $0x1e0] sm:$0xff]
    %v206 = vld [vmem:[#allocation5 + $0x1e8] sm:$0xff]
    %v207 = vld [vmem:[#allocation5 + $0x1f0] sm:$0xff]
    %v208 = vld [vmem:[#allocation5 + $0x1f8] sm:$0xff]
    %v209 = vld [vmem:[#allocation5 + $0x200] sm:$0xff]
    %v210 = vld [vmem:[#allocation5 + $0x208] sm:$0xff]
    %v211 = vld [vmem:[#allocation5 + $0x210] sm:$0xff]
    %v212 = vld [vmem:[#allocation5 + $0x218] sm:$0xff]
    %v213 = vld [vmem:[#allocation5 + $0x220] sm:$0xff]
    %v214 = vld [vmem:[#allocation5 + $0x228] sm:$0xff]
    %v215 = vld [vmem:[#allocation5 + $0x230] sm:$0xff]
    %v216 = vld [vmem:[#allocation5 + $0x238] sm:$0xff]
    %v217 = vld [vmem:[#allocation5 + $0x240] sm:$0xff]
    %v218 = vld [vmem:[#allocation5 + $0x248] sm:$0xff]
    %v219 = vld [vmem:[#allocation5 + $0x250] sm:$0xff]
    %v220 = vld [vmem:[#allocation5 + $0x258] sm:$0xff]
    %v221 = vld [vmem:[#allocation5 + $0x260] sm:$0xff]
    %v222 = vld [vmem:[#allocation5 + $0x268] sm:$0xff]
    %v223 = vld [vmem:[#allocation5 + $0x270] sm:$0xff]
    %v224 = vld [vmem:[#allocation5 + $0x278] sm:$0xff]
    %v225 = vld [vmem:[#allocation5 + $0x280] sm:$0xff]
    %v226 = vld [vmem:[#allocation5 + $0x288] sm:$0xff]
    %v227 = vld [vmem:[#allocation5 + $0x290] sm:$0xff]
    %v228 = vld [vmem:[#allocation5 + $0x298] sm:$0xff]
    %v229 = vld [vmem:[#allocation5 + $0x2a0] sm:$0xff]
    %v230 = vld [vmem:[#allocation5 + $0x2a8] sm:$0xff]
    %v231 = vld [vmem:[#allocation5 + $0x2b0] sm:$0xff]
    %v232 = vld [vmem:[#allocation5 + $0x2b8] sm:$0xff]
    %v233 = vld [vmem:[#allocation5 + $0x2c0] sm:$0xff]
    %v234 = vld [vmem:[#allocation5 + $0x2c8] sm:$0xff]
    %v235 = vld [vmem:[#allocation5 + $0x2d0] sm:$0xff]
    %v236 = vld [vmem:[#allocation5 + $0x2d8] sm:$0xff]
    %v237 = vld [vmem:[#allocation5 + $0x2e0] sm:$0xff]
    %v238 = vld [vmem:[#allocation5 + $0x2e8] sm:$0xff]
    %v239 = vld [vmem:[#allocation5 + $0x2f0] sm:$0xff]
    %v240 = vld [vmem:[#allocation5 + $0x2f8] sm:$0xff]
    %v241 = vld [vmem:[#allocation5 + $0x300] sm:$0xff]
    %v242 = vld [vmem:[#allocation5 + $0x308] sm:$0xff]
    %v243 = vld [vmem:[#allocation5 + $0x310] sm:$0xff]
    %v244 = vld [vmem:[#allocation5 + $0x318] sm:$0xff]
    %v245 = vld [vmem:[#allocation5 + $0x320] sm:$0xff]
    %v246 = vld [vmem:[#allocation5 + $0x328] sm:$0xff]
    %v247 = vld [vmem:[#allocation5 + $0x330] sm:$0xff]
    %v248 = vld [vmem:[#allocation5 + $0x338] sm:$0xff]
    %v249 = vld [vmem:[#allocation5 + $0x340] sm:$0xff]
    %v250 = vld [vmem:[#allocation5 + $0x348] sm:$0xff]
    %v251 = vld [vmem:[#allocation5 + $0x350] sm:$0xff]
    %v252 = vld [vmem:[#allocation5 + $0x358] sm:$0xff]
    %v253 = vld [vmem:[#allocation5 + $0x360] sm:$0xff]
    %v254 = vld [vmem:[#allocation5 + $0x368] sm:$0xff]
    %v255 = vld [vmem:[#allocation5 + $0x370] sm:$0xff]
    %v256 = vld [vmem:[#allocation5 + $0x378] sm:$0xff]
    %v257 = vld [vmem:[#allocation5 + $0x380] sm:$0xff]
    %v258 = vld [vmem:[#allocation5 + $0x388] sm:$0xff]
    %v259 = vld [vmem:[#allocation5 + $0x390] sm:$0xff]
    %v260 = vld [vmem:[#allocation5 + $0x398] sm:$0xff]
    %v261 = vld [vmem:[#allocation5 + $0x3a0] sm:$0xff]
    %v262 = vld [vmem:[#allocation5 + $0x3a8] sm:$0xff]
    %v263 = vld [vmem:[#allocation5 + $0x3b0] sm:$0xff]
    %v264 = vld [vmem:[#allocation5 + $0x3b8] sm:$0xff]
    %v265 = vld [vmem:[#allocation5 + $0x3c0] sm:$0xff]
    %v266 = vld [vmem:[#allocation5 + $0x3c8] sm:$0xff]
    %v267 = vld [vmem:[#allocation5 + $0x3d0] sm:$0xff]
    %v268 = vld [vmem:[#allocation5 + $0x3d8] sm:$0xff]
    %v269 = vld [vmem:[#allocation5 + $0x3e0] sm:$0xff]
    %v270 = vld [vmem:[#allocation5 + $0x3e8] sm:$0xff]
    %v271 = vld [vmem:[#allocation5 + $0x3f0] sm:$0xff]
    %v272 = vld [vmem:[#allocation5 + $0x3f8] sm:$0xff]
    %v273 = vld [vmem:[#allocation5 + $0x400] sm:$0xff]
    %v274 = vld [vmem:[#allocation5 + $0x408] sm:$0xff]
    %v275 = vld [vmem:[#allocation5 + $0x410] sm:$0xff]
    %v276 = vld [vmem:[#allocation5 + $0x418] sm:$0xff]
    %v277 = vld [vmem:[#allocation5 + $0x420] sm:$0xff]
    %v278 = vld [vmem:[#allocation5 + $0x428] sm:$0xff]
    %v279 = vld [vmem:[#allocation5 + $0x430] sm:$0xff]
    %v280 = vld [vmem:[#allocation5 + $0x438] sm:$0xff]
    %v281 = vld [vmem:[#allocation5 + $0x440] sm:$0xff]
    %v282 = vld [vmem:[#allocation5 + $0x448] sm:$0xff]
    %v283 = vld [vmem:[#allocation5 + $0x450] sm:$0xff]
    %v284 = vld [vmem:[#allocation5 + $0x458] sm:$0xff]
    %v285 = vld [vmem:[#allocation5 + $0x460] sm:$0xff]
    %v286 = vld [vmem:[#allocation5 + $0x468] sm:$0xff]
    %v287 = vld [vmem:[#allocation5 + $0x470] sm:$0xff]
    %v288 = vld [vmem:[#allocation5 + $0x478] sm:$0xff]
    %v289 = vld [vmem:[#allocation5 + $0x480] sm:$0xff]
    %v290 = vld [vmem:[#allocation5 + $0x488] sm:$0xff]
    %v291 = vld [vmem:[#allocation5 + $0x490] sm:$0xff]
    %v292 = vld [vmem:[#allocation5 + $0x498] sm:$0xff]
    %v293 = vld [vmem:[#allocation5 + $0x4a0] sm:$0xff]
    %v294 = vld [vmem:[#allocation5 + $0x4a8] sm:$0xff]
    %v295 = vld [vmem:[#allocation5 + $0x4b0] sm:$0xff]
    %v296 = vld [vmem:[#allocation5 + $0x4b8] sm:$0xff]
    %v297 = vld [vmem:[#allocation5 + $0x4c0] sm:$0xff]
    %v298 = vld [vmem:[#allocation5 + $0x4c8] sm:$0xff]
    %v299 = vld [vmem:[#allocation5 + $0x4d0] sm:$0xff]
    %v300 = vld [vmem:[#allocation5 + $0x4d8] sm:$0xff]
    %v301 = vld [vmem:[#allocation5 + $0x4e0] sm:$0xff]
    %v302 = vld [vmem:[#allocation5 + $0x4e8] sm:$0xff]
    %v303 = vld [vmem:[#allocation5 + $0x4f0] sm:$0xff]
    %v304 = vld [vmem:[#allocation5 + $0x4f8] sm:$0xff]
    %v305 = vld [vmem:[#allocation5 + $0x500] sm:$0xff]
    %v306 = vld [vmem:[#allocation5 + $0x508] sm:$0xff]
    %v307 = vld [vmem:[#allocation5 + $0x510] sm:$0xff]
    %v308 = vld [vmem:[#allocation5 + $0x518] sm:$0xff]
    %v309 = vld [vmem:[#allocation5 + $0x520] sm:$0xff]
    %v310 = vld [vmem:[#allocation5 + $0x528] sm:$0xff]
    %v311 = vld [vmem:[#allocation5 + $0x530] sm:$0xff]
    %v312 = vld [vmem:[#allocation5 + $0x538] sm:$0xff]
    %v313 = vld [vmem:[#allocation5 + $0x540] sm:$0xff]
    %v314 = vld [vmem:[#allocation5 + $0x548] sm:$0xff]
    %v315 = vld [vmem:[#allocation5 + $0x550] sm:$0xff]
    %v316 = vld [vmem:[#allocation5 + $0x558] sm:$0xff]
    %v317 = vld [vmem:[#allocation5 + $0x560] sm:$0xff]
    %v318 = vld [vmem:[#allocation5 + $0x568] sm:$0xff]
    %v319 = vld [vmem:[#allocation5 + $0x570] sm:$0xff]
    %v320 = vld [vmem:[#allocation5 + $0x578] sm:$0xff]
    %v321 = vld [vmem:[#allocation5 + $0x580] sm:$0xff]
    %v322 = vld [vmem:[#allocation5 + $0x588] sm:$0xff]
    %v323 = vld [vmem:[#allocation5 + $0x590] sm:$0xff]
    %v324 = vld [vmem:[#allocation5 + $0x598] sm:$0xff]
    %v325 = vld [vmem:[#allocation5 + $0x5a0] sm:$0xff]
    %v326 = vld [vmem:[#allocation5 + $0x5a8] sm:$0xff]
    %v327 = vld [vmem:[#allocation5 + $0x5b0] sm:$0xff]
    %v328 = vld [vmem:[#allocation5 + $0x5b8] sm:$0xff]
    %v329 = vld [vmem:[#allocation5 + $0x5c0] sm:$0xff]
    %v330 = vld [vmem:[#allocation5 + $0x5c8] sm:$0xff]
    %v331 = vld [vmem:[#allocation5 + $0x5d0] sm:$0xff]
    %v332 = vld [vmem:[#allocation5 + $0x5d8] sm:$0xff]
    %v333 = vld [vmem:[#allocation5 + $0x5e0] sm:$0xff]
    %v334 = vld [vmem:[#allocation5 + $0x5e8] sm:$0xff]
    %v335 = vld [vmem:[#allocation5 + $0x5f0] sm:$0xff]
    %v336 = vld [vmem:[#allocation5 + $0x5f8] sm:$0xff]
    %v337 = vld [vmem:[%s2] sm:$0xf]
    %v339 = vlaneseq
    %v340 = vshrl.u32 %v339, 7
    %v341 = vsub.s32 0, %v340
    %v342 = vrot.slane %v337, %v341
    %v343 = vlaneseq
    %v344 = vshrl.u32 %v343, 7
    %v345 = vsub.s32 1, %v344
    %v346 = vrot.slane %v337, %v345
    %v347 = vlaneseq
    %v348 = vshrl.u32 %v347, 7
    %v349 = vsub.s32 2, %v348
    %v350 = vrot.slane %v337, %v349
    %v351 = vlaneseq
    %v352 = vshrl.u32 %v351, 7
    %v353 = vsub.s32 3, %v352
    %v354 = vrot.slane %v337, %v353
    %v551 = vunpack.c.l.b16 %v145
    %v552 = vunpack.c.h.b16 %v145
    %v553 = vunpack.c.l.b16 %v146
    %v554 = vunpack.c.h.b16 %v146
    %v555 = vunpack.c.l.b16 %v147
    %v556 = vunpack.c.h.b16 %v147
    %v557 = vunpack.c.l.b16 %v148
    %v558 = vunpack.c.h.b16 %v148
    %v559 = vunpack.c.l.b16 %v149
    %v560 = vunpack.c.h.b16 %v149
    %v561 = vunpack.c.l.b16 %v150
    %v562 = vunpack.c.h.b16 %v150
    %v563 = vunpack.c.l.b16 %v151
    %v564 = vunpack.c.h.b16 %v151
    %v565 = vunpack.c.l.b16 %v152
    %v566 = vunpack.c.h.b16 %v152
    %v567 = vunpack.c.l.b16 %v153
    %v568 = vunpack.c.h.b16 %v153
    %v569 = vunpack.c.l.b16 %v154
    %v570 = vunpack.c.h.b16 %v154
    %v571 = vunpack.c.l.b16 %v155
    %v572 = vunpack.c.h.b16 %v155
    %v573 = vunpack.c.l.b16 %v156
    %v574 = vunpack.c.h.b16 %v156
    %v575 = vunpack.c.l.b16 %v157
    %v576 = vunpack.c.h.b16 %v157
    %v577 = vunpack.c.l.b16 %v158
    %v578 = vunpack.c.h.b16 %v158
    %v579 = vunpack.c.l.b16 %v159
    %v580 = vunpack.c.h.b16 %v159
    %v581 = vunpack.c.l.b16 %v160
    %v582 = vunpack.c.h.b16 %v160
    %v583 = vunpack.c.l.b16 %v161
    %v584 = vunpack.c.h.b16 %v161
    %v585 = vunpack.c.l.b16 %v162
    %v586 = vunpack.c.h.b16 %v162
    %v587 = vunpack.c.l.b16 %v163
    %v588 = vunpack.c.h.b16 %v163
    %v589 = vunpack.c.l.b16 %v164
    %v590 = vunpack.c.h.b16 %v164
    %v591 = vunpack.c.l.b16 %v165
    %v592 = vunpack.c.h.b16 %v165
    %v593 = vunpack.c.l.b16 %v166
    %v594 = vunpack.c.h.b16 %v166
    %v595 = vunpack.c.l.b16 %v167
    %v596 = vunpack.c.h.b16 %v167
    %v597 = vunpack.c.l.b16 %v168
    %v598 = vunpack.c.h.b16 %v168
    %v599 = vunpack.c.l.b16 %v169
    %v600 = vunpack.c.h.b16 %v169
    %v601 = vunpack.c.l.b16 %v170
    %v602 = vunpack.c.h.b16 %v170
    %v603 = vunpack.c.l.b16 %v171
    %v604 = vunpack.c.h.b16 %v171
    %v605 = vunpack.c.l.b16 %v172
    %v606 = vunpack.c.h.b16 %v172
    %v607 = vunpack.c.l.b16 %v173
    %v608 = vunpack.c.h.b16 %v173
    %v609 = vunpack.c.l.b16 %v174
    %v610 = vunpack.c.h.b16 %v174
    %v611 = vunpack.c.l.b16 %v175
    %v612 = vunpack.c.h.b16 %v175
    %v613 = vunpack.c.l.b16 %v176
    %v614 = vunpack.c.h.b16 %v176
    %v615 = vunpack.c.l.b16 %v177
    %v616 = vunpack.c.h.b16 %v177
    %v617 = vunpack.c.l.b16 %v178
    %v618 = vunpack.c.h.b16 %v178
    %v619 = vunpack.c.l.b16 %v179
    %v620 = vunpack.c.h.b16 %v179
    %v621 = vunpack.c.l.b16 %v180
    %v622 = vunpack.c.h.b16 %v180
    %v623 = vunpack.c.l.b16 %v181
    %v624 = vunpack.c.h.b16 %v181
    %v625 = vunpack.c.l.b16 %v182
    %v626 = vunpack.c.h.b16 %v182
    %v627 = vunpack.c.l.b16 %v183
    %v628 = vunpack.c.h.b16 %v183
    %v629 = vunpack.c.l.b16 %v184
    %v630 = vunpack.c.h.b16 %v184
    %v631 = vunpack.c.l.b16 %v185
    %v632 = vunpack.c.h.b16 %v185
    %v633 = vunpack.c.l.b16 %v186
    %v634 = vunpack.c.h.b16 %v186
    %v635 = vunpack.c.l.b16 %v187
    %v636 = vunpack.c.h.b16 %v187
    %v637 = vunpack.c.l.b16 %v188
    %v638 = vunpack.c.h.b16 %v188
    %v639 = vunpack.c.l.b16 %v189
    %v640 = vunpack.c.h.b16 %v189
    %v641 = vunpack.c.l.b16 %v190
    %v642 = vunpack.c.h.b16 %v190
    %v643 = vunpack.c.l.b16 %v191
    %v644 = vunpack.c.h.b16 %v191
    %v645 = vunpack.c.l.b16 %v192
    %v646 = vunpack.c.h.b16 %v192
    %v647 = vunpack.c.l.b16 %v193
    %v648 = vunpack.c.h.b16 %v193
    %v649 = vunpack.c.l.b16 %v194
    %v650 = vunpack.c.h.b16 %v194
    %v651 = vunpack.c.l.b16 %v195
    %v652 = vunpack.c.h.b16 %v195
    %v653 = vunpack.c.l.b16 %v196
    %v654 = vunpack.c.h.b16 %v196
    %v655 = vunpack.c.l.b16 %v197
    %v656 = vunpack.c.h.b16 %v197
    %v657 = vunpack.c.l.b16 %v198
    %v658 = vunpack.c.h.b16 %v198
    %v659 = vunpack.c.l.b16 %v199
    %v660 = vunpack.c.h.b16 %v199
    %v661 = vunpack.c.l.b16 %v200
    %v662 = vunpack.c.h.b16 %v200
    %v663 = vunpack.c.l.b16 %v201
    %v664 = vunpack.c.h.b16 %v201
    %v665 = vunpack.c.l.b16 %v202
    %v666 = vunpack.c.h.b16 %v202
    %v667 = vunpack.c.l.b16 %v203
    %v668 = vunpack.c.h.b16 %v203
    %v669 = vunpack.c.l.b16 %v204
    %v670 = vunpack.c.h.b16 %v204
    %v671 = vunpack.c.l.b16 %v205
    %v672 = vunpack.c.h.b16 %v205
    %v673 = vunpack.c.l.b16 %v206
    %v674 = vunpack.c.h.b16 %v206
    %v675 = vunpack.c.l.b16 %v207
    %v676 = vunpack.c.h.b16 %v207
    %v677 = vunpack.c.l.b16 %v208
    %v678 = vunpack.c.h.b16 %v208
    %v679 = vunpack.c.l.b16 %v209
    %v680 = vunpack.c.h.b16 %v209
    %v681 = vunpack.c.l.b16 %v210
    %v682 = vunpack.c.h.b16 %v210
    %v683 = vunpack.c.l.b16 %v211
    %v684 = vunpack.c.h.b16 %v211
    %v685 = vunpack.c.l.b16 %v212
    %v686 = vunpack.c.h.b16 %v212
    %v687 = vunpack.c.l.b16 %v213
    %v688 = vunpack.c.h.b16 %v213
    %v689 = vunpack.c.l.b16 %v214
    %v690 = vunpack.c.h.b16 %v214
    %v691 = vunpack.c.l.b16 %v215
    %v692 = vunpack.c.h.b16 %v215
    %v693 = vunpack.c.l.b16 %v216
    %v694 = vunpack.c.h.b16 %v216
    %v695 = vunpack.c.l.b16 %v217
    %v696 = vunpack.c.h.b16 %v217
    %v697 = vunpack.c.l.b16 %v218
    %v698 = vunpack.c.h.b16 %v218
    %v699 = vunpack.c.l.b16 %v219
    %v700 = vunpack.c.h.b16 %v219
    %v701 = vunpack.c.l.b16 %v220
    %v702 = vunpack.c.h.b16 %v220
    %v703 = vunpack.c.l.b16 %v221
    %v704 = vunpack.c.h.b16 %v221
    %v705 = vunpack.c.l.b16 %v222
    %v706 = vunpack.c.h.b16 %v222
    %v707 = vunpack.c.l.b16 %v223
    %v708 = vunpack.c.h.b16 %v223
    %v709 = vunpack.c.l.b16 %v224
    %v710 = vunpack.c.h.b16 %v224
    %v711 = vunpack.c.l.b16 %v225
    %v712 = vunpack.c.h.b16 %v225
    %v713 = vunpack.c.l.b16 %v226
    %v714 = vunpack.c.h.b16 %v226
    %v715 = vunpack.c.l.b16 %v227
    %v716 = vunpack.c.h.b16 %v227
    %v717 = vunpack.c.l.b16 %v228
    %v718 = vunpack.c.h.b16 %v228
    %v719 = vunpack.c.l.b16 %v229
    %v720 = vunpack.c.h.b16 %v229
    %v721 = vunpack.c.l.b16 %v230
    %v722 = vunpack.c.h.b16 %v230
    %v723 = vunpack.c.l.b16 %v231
    %v724 = vunpack.c.h.b16 %v231
    %v725 = vunpack.c.l.b16 %v232
    %v726 = vunpack.c.h.b16 %v232
    %v727 = vunpack.c.l.b16 %v233
    %v728 = vunpack.c.h.b16 %v233
    %v729 = vunpack.c.l.b16 %v234
    %v730 = vunpack.c.h.b16 %v234
    %v731 = vunpack.c.l.b16 %v235
    %v732 = vunpack.c.h.b16 %v235
    %v733 = vunpack.c.l.b16 %v236
    %v734 = vunpack.c.h.b16 %v236
    %v735 = vunpack.c.l.b16 %v237
    %v736 = vunpack.c.h.b16 %v237
    %v737 = vunpack.c.l.b16 %v238
    %v738 = vunpack.c.h.b16 %v238
    %v739 = vunpack.c.l.b16 %v239
    %v740 = vunpack.c.h.b16 %v239
    %v741 = vunpack.c.l.b16 %v240
    %v742 = vunpack.c.h.b16 %v240
    %v743 = vunpack.c.l.b16 %v241
    %v744 = vunpack.c.h.b16 %v241
    %v745 = vunpack.c.l.b16 %v242
    %v746 = vunpack.c.h.b16 %v242
    %v747 = vunpack.c.l.b16 %v243
    %v748 = vunpack.c.h.b16 %v243
    %v749 = vunpack.c.l.b16 %v244
    %v750 = vunpack.c.h.b16 %v244
    %v751 = vunpack.c.l.b16 %v245
    %v752 = vunpack.c.h.b16 %v245
    %v753 = vunpack.c.l.b16 %v246
    %v754 = vunpack.c.h.b16 %v246
    %v755 = vunpack.c.l.b16 %v247
    %v756 = vunpack.c.h.b16 %v247
    %v757 = vunpack.c.l.b16 %v248
    %v758 = vunpack.c.h.b16 %v248
    %v759 = vunpack.c.l.b16 %v249
    %v760 = vunpack.c.h.b16 %v249
    %v761 = vunpack.c.l.b16 %v250
    %v762 = vunpack.c.h.b16 %v250
    %v763 = vunpack.c.l.b16 %v251
    %v764 = vunpack.c.h.b16 %v251
    %v765 = vunpack.c.l.b16 %v252
    %v766 = vunpack.c.h.b16 %v252
    %v767 = vunpack.c.l.b16 %v253
    %v768 = vunpack.c.h.b16 %v253
    %v769 = vunpack.c.l.b16 %v254
    %v770 = vunpack.c.h.b16 %v254
    %v771 = vunpack.c.l.b16 %v255
    %v772 = vunpack.c.h.b16 %v255
    %v773 = vunpack.c.l.b16 %v256
    %v774 = vunpack.c.h.b16 %v256
    %v775 = vunpack.c.l.b16 %v257
    %v776 = vunpack.c.h.b16 %v257
    %v777 = vunpack.c.l.b16 %v258
    %v778 = vunpack.c.h.b16 %v258
    %v779 = vunpack.c.l.b16 %v259
    %v780 = vunpack.c.h.b16 %v259
    %v781 = vunpack.c.l.b16 %v260
    %v782 = vunpack.c.h.b16 %v260
    %v783 = vunpack.c.l.b16 %v261
    %v784 = vunpack.c.h.b16 %v261
    %v785 = vunpack.c.l.b16 %v262
    %v786 = vunpack.c.h.b16 %v262
    %v787 = vunpack.c.l.b16 %v263
    %v788 = vunpack.c.h.b16 %v263
    %v789 = vunpack.c.l.b16 %v264
    %v790 = vunpack.c.h.b16 %v264
    %v791 = vunpack.c.l.b16 %v265
    %v792 = vunpack.c.h.b16 %v265
    %v793 = vunpack.c.l.b16 %v266
    %v794 = vunpack.c.h.b16 %v266
    %v795 = vunpack.c.l.b16 %v267
    %v796 = vunpack.c.h.b16 %v267
    %v797 = vunpack.c.l.b16 %v268
    %v798 = vunpack.c.h.b16 %v268
    %v799 = vunpack.c.l.b16 %v269
    %v800 = vunpack.c.h.b16 %v269
    %v801 = vunpack.c.l.b16 %v270
    %v802 = vunpack.c.h.b16 %v270
    %v803 = vunpack.c.l.b16 %v271
    %v804 = vunpack.c.h.b16 %v271
    %v805 = vunpack.c.l.b16 %v272
    %v806 = vunpack.c.h.b16 %v272
    %v807 = vunpack.c.l.b16 %v273
    %v808 = vunpack.c.h.b16 %v273
    %v809 = vunpack.c.l.b16 %v274
    %v810 = vunpack.c.h.b16 %v274
    %v811 = vunpack.c.l.b16 %v275
    %v812 = vunpack.c.h.b16 %v275
    %v813 = vunpack.c.l.b16 %v276
    %v814 = vunpack.c.h.b16 %v276
    %v815 = vunpack.c.l.b16 %v277
    %v816 = vunpack.c.h.b16 %v277
    %v817 = vunpack.c.l.b16 %v278
    %v818 = vunpack.c.h.b16 %v278
    %v819 = vunpack.c.l.b16 %v279
    %v820 = vunpack.c.h.b16 %v279
    %v821 = vunpack.c.l.b16 %v280
    %v822 = vunpack.c.h.b16 %v280
    %v823 = vunpack.c.l.b16 %v281
    %v824 = vunpack.c.h.b16 %v281
    %v825 = vunpack.c.l.b16 %v282
    %v826 = vunpack.c.h.b16 %v282
    %v827 = vunpack.c.l.b16 %v283
    %v828 = vunpack.c.h.b16 %v283
    %v829 = vunpack.c.l.b16 %v284
    %v830 = vunpack.c.h.b16 %v284
    %v831 = vunpack.c.l.b16 %v285
    %v832 = vunpack.c.h.b16 %v285
    %v833 = vunpack.c.l.b16 %v286
    %v834 = vunpack.c.h.b16 %v286
    %v835 = vunpack.c.l.b16 %v287
    %v836 = vunpack.c.h.b16 %v287
    %v837 = vunpack.c.l.b16 %v288
    %v838 = vunpack.c.h.b16 %v288
    %v839 = vunpack.c.l.b16 %v289
    %v840 = vunpack.c.h.b16 %v289
    %v841 = vunpack.c.l.b16 %v290
    %v842 = vunpack.c.h.b16 %v290
    %v843 = vunpack.c.l.b16 %v291
    %v844 = vunpack.c.h.b16 %v291
    %v845 = vunpack.c.l.b16 %v292
    %v846 = vunpack.c.h.b16 %v292
    %v847 = vunpack.c.l.b16 %v293
    %v848 = vunpack.c.h.b16 %v293
    %v849 = vunpack.c.l.b16 %v294
    %v850 = vunpack.c.h.b16 %v294
    %v851 = vunpack.c.l.b16 %v295
    %v852 = vunpack.c.h.b16 %v295
    %v853 = vunpack.c.l.b16 %v296
    %v854 = vunpack.c.h.b16 %v296
    %v855 = vunpack.c.l.b16 %v297
    %v856 = vunpack.c.h.b16 %v297
    %v857 = vunpack.c.l.b16 %v298
    %v858 = vunpack.c.h.b16 %v298
    %v859 = vunpack.c.l.b16 %v299
    %v860 = vunpack.c.h.b16 %v299
    %v861 = vunpack.c.l.b16 %v300
    %v862 = vunpack.c.h.b16 %v300
    %v863 = vunpack.c.l.b16 %v301
    %v864 = vunpack.c.h.b16 %v301
    %v865 = vunpack.c.l.b16 %v302
    %v866 = vunpack.c.h.b16 %v302
    %v867 = vunpack.c.l.b16 %v303
    %v868 = vunpack.c.h.b16 %v303
    %v869 = vunpack.c.l.b16 %v304
    %v870 = vunpack.c.h.b16 %v304
    %v871 = vunpack.c.l.b16 %v305
    %v872 = vunpack.c.h.b16 %v305
    %v873 = vunpack.c.l.b16 %v306
    %v874 = vunpack.c.h.b16 %v306
    %v875 = vunpack.c.l.b16 %v307
    %v876 = vunpack.c.h.b16 %v307
    %v877 = vunpack.c.l.b16 %v308
    %v878 = vunpack.c.h.b16 %v308
    %v879 = vunpack.c.l.b16 %v309
    %v880 = vunpack.c.h.b16 %v309
    %v881 = vunpack.c.l.b16 %v310
    %v882 = vunpack.c.h.b16 %v310
    %v883 = vunpack.c.l.b16 %v311
    %v884 = vunpack.c.h.b16 %v311
    %v885 = vunpack.c.l.b16 %v312
    %v886 = vunpack.c.h.b16 %v312
    %v887 = vunpack.c.l.b16 %v313
    %v888 = vunpack.c.h.b16 %v313
    %v889 = vunpack.c.l.b16 %v314
    %v890 = vunpack.c.h.b16 %v314
    %v891 = vunpack.c.l.b16 %v315
    %v892 = vunpack.c.h.b16 %v315
    %v893 = vunpack.c.l.b16 %v316
    %v894 = vunpack.c.h.b16 %v316
    %v895 = vunpack.c.l.b16 %v317
    %v896 = vunpack.c.h.b16 %v317
    %v897 = vunpack.c.l.b16 %v318
    %v898 = vunpack.c.h.b16 %v318
    %v899 = vunpack.c.l.b16 %v319
    %v900 = vunpack.c.h.b16 %v319
    %v901 = vunpack.c.l.b16 %v320
    %v902 = vunpack.c.h.b16 %v320
    %v903 = vunpack.c.l.b16 %v321
    %v904 = vunpack.c.h.b16 %v321
    %v905 = vunpack.c.l.b16 %v322
    %v906 = vunpack.c.h.b16 %v322
    %v907 = vunpack.c.l.b16 %v323
    %v908 = vunpack.c.h.b16 %v323
    %v909 = vunpack.c.l.b16 %v324
    %v910 = vunpack.c.h.b16 %v324
    %v911 = vunpack.c.l.b16 %v325
    %v912 = vunpack.c.h.b16 %v325
    %v913 = vunpack.c.l.b16 %v326
    %v914 = vunpack.c.h.b16 %v326
    %v915 = vunpack.c.l.b16 %v327
    %v916 = vunpack.c.h.b16 %v327
    %v917 = vunpack.c.l.b16 %v328
    %v918 = vunpack.c.h.b16 %v328
    %v919 = vunpack.c.l.b16 %v329
    %v920 = vunpack.c.h.b16 %v329
    %v921 = vunpack.c.l.b16 %v330
    %v922 = vunpack.c.h.b16 %v330
    %v923 = vunpack.c.l.b16 %v331
    %v924 = vunpack.c.h.b16 %v331
    %v925 = vunpack.c.l.b16 %v332
    %v926 = vunpack.c.h.b16 %v332
    %v927 = vunpack.c.l.b16 %v333
    %v928 = vunpack.c.h.b16 %v333
    %v929 = vunpack.c.l.b16 %v334
    %v930 = vunpack.c.h.b16 %v334
    %v931 = vunpack.c.l.b16 %v335
    %v932 = vunpack.c.h.b16 %v335
    %v933 = vunpack.c.l.b16 %v336
    %v934 = vunpack.c.h.b16 %v336
    %v935 = vpack.c.b16 %v555, %v551
    %v936 = vpack.c.b16 %v556, %v552
    %v937 = vpack.c.b16 %v557, %v553
    %v938 = vpack.c.b16 %v558, %v554
    %v939 = vpack.c.b16 %v563, %v559
    %v940 = vpack.c.b16 %v564, %v560
    %v941 = vpack.c.b16 %v565, %v561
    %v942 = vpack.c.b16 %v566, %v562
    %v943 = vpack.c.b16 %v571, %v567
    %v944 = vpack.c.b16 %v572, %v568
    %v945 = vpack.c.b16 %v573, %v569
    %v946 = vpack.c.b16 %v574, %v570
    %v947 = vpack.c.b16 %v579, %v575
    %v948 = vpack.c.b16 %v580, %v576
    %v949 = vpack.c.b16 %v581, %v577
    %v950 = vpack.c.b16 %v582, %v578
    %v951 = vpack.c.b16 %v587, %v583
    %v952 = vpack.c.b16 %v588, %v584
    %v953 = vpack.c.b16 %v589, %v585
    %v954 = vpack.c.b16 %v590, %v586
    %v955 = vpack.c.b16 %v595, %v591
    %v956 = vpack.c.b16 %v596, %v592
    %v957 = vpack.c.b16 %v597, %v593
    %v958 = vpack.c.b16 %v598, %v594
    %v959 = vpack.c.b16 %v603, %v599
    %v960 = vpack.c.b16 %v604, %v600
    %v961 = vpack.c.b16 %v605, %v601
    %v962 = vpack.c.b16 %v606, %v602
    %v963 = vpack.c.b16 %v611, %v607
    %v964 = vpack.c.b16 %v612, %v608
    %v965 = vpack.c.b16 %v613, %v609
    %v966 = vpack.c.b16 %v614, %v610
    %v967 = vpack.c.b16 %v619, %v615
    %v968 = vpack.c.b16 %v620, %v616
    %v969 = vpack.c.b16 %v621, %v617
    %v970 = vpack.c.b16 %v622, %v618
    %v971 = vpack.c.b16 %v627, %v623
    %v972 = vpack.c.b16 %v628, %v624
    %v973 = vpack.c.b16 %v629, %v625
    %v974 = vpack.c.b16 %v630, %v626
    %v975 = vpack.c.b16 %v635, %v631
    %v976 = vpack.c.b16 %v636, %v632
    %v977 = vpack.c.b16 %v637, %v633
    %v978 = vpack.c.b16 %v638, %v634
    %v979 = vpack.c.b16 %v643, %v639
    %v980 = vpack.c.b16 %v644, %v640
    %v981 = vpack.c.b16 %v645, %v641
    %v982 = vpack.c.b16 %v646, %v642
    %v983 = vpack.c.b16 %v651, %v647
    %v984 = vpack.c.b16 %v652, %v648
    %v985 = vpack.c.b16 %v653, %v649
    %v986 = vpack.c.b16 %v654, %v650
    %v987 = vpack.c.b16 %v659, %v655
    %v988 = vpack.c.b16 %v660, %v656
    %v989 = vpack.c.b16 %v661, %v657
    %v990 = vpack.c.b16 %v662, %v658
    %v991 = vpack.c.b16 %v667, %v663
    %v992 = vpack.c.b16 %v668, %v664
    %v993 = vpack.c.b16 %v669, %v665
    %v994 = vpack.c.b16 %v670, %v666
    %v995 = vpack.c.b16 %v675, %v671
    %v996 = vpack.c.b16 %v676, %v672
    %v997 = vpack.c.b16 %v677, %v673
    %v998 = vpack.c.b16 %v678, %v674
    %v999 = vpack.c.b16 %v683, %v679
    %v1000 = vpack.c.b16 %v684, %v680
    %v1001 = vpack.c.b16 %v685, %v681
    %v1002 = vpack.c.b16 %v686, %v682
    %v1003 = vpack.c.b16 %v691, %v687
    %v1004 = vpack.c.b16 %v692, %v688
    %v1005 = vpack.c.b16 %v693, %v689
    %v1006 = vpack.c.b16 %v694, %v690
    %v1007 = vpack.c.b16 %v699, %v695
    %v1008 = vpack.c.b16 %v700, %v696
    %v1009 = vpack.c.b16 %v701, %v697
    %v1010 = vpack.c.b16 %v702, %v698
    %v1011 = vpack.c.b16 %v707, %v703
    %v1012 = vpack.c.b16 %v708, %v704
    %v1013 = vpack.c.b16 %v709, %v705
    %v1014 = vpack.c.b16 %v710, %v706
    %v1015 = vpack.c.b16 %v715, %v711
    %v1016 = vpack.c.b16 %v716, %v712
    %v1017 = vpack.c.b16 %v717, %v713
    %v1018 = vpack.c.b16 %v718, %v714
    %v1019 = vpack.c.b16 %v723, %v719
    %v1020 = vpack.c.b16 %v724, %v720
    %v1021 = vpack.c.b16 %v725, %v721
    %v1022 = vpack.c.b16 %v726, %v722
    %v1023 = vpack.c.b16 %v731, %v727
    %v1024 = vpack.c.b16 %v732, %v728
    %v1025 = vpack.c.b16 %v733, %v729
    %v1026 = vpack.c.b16 %v734, %v730
    %v1027 = vpack.c.b16 %v739, %v735
    %v1028 = vpack.c.b16 %v740, %v736
    %v1029 = vpack.c.b16 %v741, %v737
    %v1030 = vpack.c.b16 %v742, %v738
    %v1031 = vpack.c.b16 %v747, %v743
    %v1032 = vpack.c.b16 %v748, %v744
    %v1033 = vpack.c.b16 %v749, %v745
    %v1034 = vpack.c.b16 %v750, %v746
    %v1035 = vpack.c.b16 %v755, %v751
    %v1036 = vpack.c.b16 %v756, %v752
    %v1037 = vpack.c.b16 %v757, %v753
    %v1038 = vpack.c.b16 %v758, %v754
    %v1039 = vpack.c.b16 %v763, %v759
    %v1040 = vpack.c.b16 %v764, %v760
    %v1041 = vpack.c.b16 %v765, %v761
    %v1042 = vpack.c.b16 %v766, %v762
    %v1043 = vpack.c.b16 %v771, %v767
    %v1044 = vpack.c.b16 %v772, %v768
    %v1045 = vpack.c.b16 %v773, %v769
    %v1046 = vpack.c.b16 %v774, %v770
    %v1047 = vpack.c.b16 %v779, %v775
    %v1048 = vpack.c.b16 %v780, %v776
    %v1049 = vpack.c.b16 %v781, %v777
    %v1050 = vpack.c.b16 %v782, %v778
    %v1051 = vpack.c.b16 %v787, %v783
    %v1052 = vpack.c.b16 %v788, %v784
    %v1053 = vpack.c.b16 %v789, %v785
    %v1054 = vpack.c.b16 %v790, %v786
    %v1055 = vpack.c.b16 %v795, %v791
    %v1056 = vpack.c.b16 %v796, %v792
    %v1057 = vpack.c.b16 %v797, %v793
    %v1058 = vpack.c.b16 %v798, %v794
    %v1059 = vpack.c.b16 %v803, %v799
    %v1060 = vpack.c.b16 %v804, %v800
    %v1061 = vpack.c.b16 %v805, %v801
    %v1062 = vpack.c.b16 %v806, %v802
    %v1063 = vpack.c.b16 %v811, %v807
    %v1064 = vpack.c.b16 %v812, %v808
    %v1065 = vpack.c.b16 %v813, %v809
    %v1066 = vpack.c.b16 %v814, %v810
    %v1067 = vpack.c.b16 %v819, %v815
    %v1068 = vpack.c.b16 %v820, %v816
    %v1069 = vpack.c.b16 %v821, %v817
    %v1070 = vpack.c.b16 %v822, %v818
    %v1071 = vpack.c.b16 %v827, %v823
    %v1072 = vpack.c.b16 %v828, %v824
    %v1073 = vpack.c.b16 %v829, %v825
    %v1074 = vpack.c.b16 %v830, %v826
    %v1075 = vpack.c.b16 %v835, %v831
    %v1076 = vpack.c.b16 %v836, %v832
    %v1077 = vpack.c.b16 %v837, %v833
    %v1078 = vpack.c.b16 %v838, %v834
    %v1079 = vpack.c.b16 %v843, %v839
    %v1080 = vpack.c.b16 %v844, %v840
    %v1081 = vpack.c.b16 %v845, %v841
    %v1082 = vpack.c.b16 %v846, %v842
    %v1083 = vpack.c.b16 %v851, %v847
    %v1084 = vpack.c.b16 %v852, %v848
    %v1085 = vpack.c.b16 %v853, %v849
    %v1086 = vpack.c.b16 %v854, %v850
    %v1087 = vpack.c.b16 %v859, %v855
    %v1088 = vpack.c.b16 %v860, %v856
    %v1089 = vpack.c.b16 %v861, %v857
    %v1090 = vpack.c.b16 %v862, %v858
    %v1091 = vpack.c.b16 %v867, %v863
    %v1092 = vpack.c.b16 %v868, %v864
    %v1093 = vpack.c.b16 %v869, %v865
    %v1094 = vpack.c.b16 %v870, %v866
    %v1095 = vpack.c.b16 %v875, %v871
    %v1096 = vpack.c.b16 %v876, %v872
    %v1097 = vpack.c.b16 %v877, %v873
    %v1098 = vpack.c.b16 %v878, %v874
    %v1099 = vpack.c.b16 %v883, %v879
    %v1100 = vpack.c.b16 %v884, %v880
    %v1101 = vpack.c.b16 %v885, %v881
    %v1102 = vpack.c.b16 %v886, %v882
    %v1103 = vpack.c.b16 %v891, %v887
    %v1104 = vpack.c.b16 %v892, %v888
    %v1105 = vpack.c.b16 %v893, %v889
    %v1106 = vpack.c.b16 %v894, %v890
    %v1107 = vpack.c.b16 %v899, %v895
    %v1108 = vpack.c.b16 %v900, %v896
    %v1109 = vpack.c.b16 %v901, %v897
    %v1110 = vpack.c.b16 %v902, %v898
    %v1111 = vpack.c.b16 %v907, %v903
    %v1112 = vpack.c.b16 %v908, %v904
    %v1113 = vpack.c.b16 %v909, %v905
    %v1114 = vpack.c.b16 %v910, %v906
    %v1115 = vpack.c.b16 %v915, %v911
    %v1116 = vpack.c.b16 %v916, %v912
    %v1117 = vpack.c.b16 %v917, %v913
    %v1118 = vpack.c.b16 %v918, %v914
    %v1119 = vpack.c.b16 %v923, %v919
    %v1120 = vpack.c.b16 %v924, %v920
    %v1121 = vpack.c.b16 %v925, %v921
    %v1122 = vpack.c.b16 %v926, %v922
    %v1123 = vpack.c.b16 %v931, %v927
    %v1124 = vpack.c.b16 %v932, %v928
    %v1125 = vpack.c.b16 %v933, %v929
    %v1126 = vpack.c.b16 %v934, %v930
    %1319 = vmatprep.subr.bf16.mxu0 %v936
    %1320 = vmatpush1.bf16.msra.mxu0 %v935
    %1321 = vmatprep.subr.bf16.mxu0 %v940
    %1322 = vmatpush1.bf16.msra.mxu0 %v939
    %1323 = vmatprep.subr.bf16.mxu0 %v944
    %1324 = vmatpush1.bf16.msra.mxu0 %v943
    %1325 = vmatprep.subr.bf16.mxu0 %v948
    %1326 = vmatpush1.bf16.msra.mxu0 %v947
    %1327 = vmatprep.subr.bf16.mxu0 %v952
    %1328 = vmatpush1.bf16.msra.mxu0 %v951
    %1329 = vmatprep.subr.bf16.mxu0 %v956
    %1330 = vmatpush1.bf16.msra.mxu0 %v955
    %1331 = vmatprep.subr.bf16.mxu0 %v960
    %1332 = vmatpush1.bf16.msra.mxu0 %v959
    %1333 = vmatprep.subr.bf16.mxu0 %v964
    %1334 = vmatpush1.bf16.msra.mxu0 %v963
    %1335 = vmatprep.subr.bf16.mxu0 %v968
    %1336 = vmatpush1.bf16.msra.mxu0 %v967
    %1337 = vmatprep.subr.bf16.mxu0 %v972
    %1338 = vmatpush1.bf16.msra.mxu0 %v971
    %1339 = vmatprep.subr.bf16.mxu0 %v976
    %1340 = vmatpush1.bf16.msra.mxu0 %v975
    %1341 = vmatprep.subr.bf16.mxu0 %v980
    %1342 = vmatpush1.bf16.msra.mxu0 %v979
    %1343 = vmatprep.subr.bf16.mxu0 %v984
    %1344 = vmatpush1.bf16.msra.mxu0 %v983
    %1345 = vmatprep.subr.bf16.mxu0 %v988
    %1346 = vmatpush1.bf16.msra.mxu0 %v987
    %1347 = vmatprep.subr.bf16.mxu0 %v992
    %1348 = vmatpush1.bf16.msra.mxu0 %v991
    %1349 = vmatprep.subr.bf16.mxu0 %v996
    %1350 = vmatpush1.bf16.msra.mxu0 %v995
    %1351 = vmatprep.mubr.bf16.mxu0 %v140
    %1352 = vmatmul.mubr.bf16.gmra.mrb[0].mxu0 %v139
    %v1353 = vpop.f32.mrb[0].mxu0
    %v1354 = vadd.f32 %v342, %v1353
    %v1355 = vpop.f32.mrb[0].mxu0
    %v1356 = vadd.f32 %v346, %v1355
    %v1357 = vpop.f32.mrb[0].mxu0
    %v1358 = vpop.f32.mrb[0].mxu0
    %1359 = vdwg.mxu0
    %1360 = vmatprep.subr.bf16.mxu0 %v1000
    %1361 = vmatpush1.bf16.msra.mxu0 %v999
    %1362 = vmatprep.subr.bf16.mxu0 %v1004
    %1363 = vmatpush1.bf16.msra.mxu0 %v1003
    %1364 = vmatprep.subr.bf16.mxu0 %v1008
    %1365 = vmatpush1.bf16.msra.mxu0 %v1007
    %1366 = vmatprep.subr.bf16.mxu0 %v1012
    %1367 = vmatpush1.bf16.msra.mxu0 %v1011
    %1368 = vmatprep.subr.bf16.mxu0 %v1016
    %1369 = vmatpush1.bf16.msra.mxu0 %v1015
    %1370 = vmatprep.subr.bf16.mxu0 %v1020
    %1371 = vmatpush1.bf16.msra.mxu0 %v1019
    %1372 = vmatprep.subr.bf16.mxu0 %v1024
    %1373 = vmatpush1.bf16.msra.mxu0 %v1023
    %1374 = vmatprep.subr.bf16.mxu0 %v1028
    %1375 = vmatpush1.bf16.msra.mxu0 %v1027
    %1376 = vmatprep.subr.bf16.mxu0 %v1032
    %1377 = vmatpush1.bf16.msra.mxu0 %v1031
    %1378 = vmatprep.subr.bf16.mxu0 %v1036
    %1379 = vmatpush1.bf16.msra.mxu0 %v1035
    %1380 = vmatprep.subr.bf16.mxu0 %v1040
    %1381 = vmatpush1.bf16.msra.mxu0 %v1039
    %1382 = vmatprep.subr.bf16.mxu0 %v1044
    %1383 = vmatpush1.bf16.msra.mxu0 %v1043
    %1384 = vmatprep.subr.bf16.mxu0 %v1048
    %1385 = vmatpush1.bf16.msra.mxu0 %v1047
    %1386 = vmatprep.subr.bf16.mxu0 %v1052
    %1387 = vmatpush1.bf16.msra.mxu0 %v1051
    %1388 = vmatprep.subr.bf16.mxu0 %v1056
    %1389 = vmatpush1.bf16.msra.mxu0 %v1055
    %1390 = vmatprep.subr.bf16.mxu0 %v1060
    %1391 = vmatpush1.bf16.msra.mxu0 %v1059
    %1392 = vmatprep.mubr.bf16.mxu0 %v142
    %1393 = vmatmul.mubr.bf16.gmra.mrb[0].mxu0 %v141
    %v1394 = vpop.f32.mrb[0].mxu0
    %v1395 = vadd.f32 %v1354, %v1394
    %v1396 = vpop.f32.mrb[0].mxu0
    %v1397 = vadd.f32 %v1356, %v1396
    %v1398 = vpop.f32.mrb[0].mxu0
    %v1399 = vpop.f32.mrb[0].mxu0
    %1400 = vdwg.mxu0
    %1401 = vmatprep.subr.bf16.mxu0 %v1064
    %1402 = vmatpush1.bf16.msra.mxu0 %v1063
    %1403 = vmatprep.subr.bf16.mxu0 %v1068
    %1404 = vmatpush1.bf16.msra.mxu0 %v1067
    %1405 = vmatprep.subr.bf16.mxu0 %v1072
    %1406 = vmatpush1.bf16.msra.mxu0 %v1071
    %1407 = vmatprep.subr.bf16.mxu0 %v1076
    %1408 = vmatpush1.bf16.msra.mxu0 %v1075
    %1409 = vmatprep.subr.bf16.mxu0 %v1080
    %1410 = vmatpush1.bf16.msra.mxu0 %v1079
    %1411 = vmatprep.subr.bf16.mxu0 %v1084
    %1412 = vmatpush1.bf16.msra.mxu0 %v1083
    %1413 = vmatprep.subr.bf16.mxu0 %v1088
    %1414 = vmatpush1.bf16.msra.mxu0 %v1087
    %1415 = vmatprep.subr.bf16.mxu0 %v1092
    %1416 = vmatpush1.bf16.msra.mxu0 %v1091
    %1417 = vmatprep.subr.bf16.mxu0 %v1096
    %1418 = vmatpush1.bf16.msra.mxu0 %v1095
    %1419 = vmatprep.subr.bf16.mxu0 %v1100
    %1420 = vmatpush1.bf16.msra.mxu0 %v1099
    %1421 = vmatprep.subr.bf16.mxu0 %v1104
    %1422 = vmatpush1.bf16.msra.mxu0 %v1103
    %1423 = vmatprep.subr.bf16.mxu0 %v1108
    %1424 = vmatpush1.bf16.msra.mxu0 %v1107
    %1425 = vmatprep.subr.bf16.mxu0 %v1112
    %1426 = vmatpush1.bf16.msra.mxu0 %v1111
    %1427 = vmatprep.subr.bf16.mxu0 %v1116
    %1428 = vmatpush1.bf16.msra.mxu0 %v1115
    %1429 = vmatprep.subr.bf16.mxu0 %v1120
    %1430 = vmatpush1.bf16.msra.mxu0 %v1119
    %1431 = vmatprep.subr.bf16.mxu0 %v1124
    %1432 = vmatpush1.bf16.msra.mxu0 %v1123
    %1433 = vmatprep.mubr.bf16.mxu0 %v144
    %1434 = vmatmul.mubr.bf16.gmra.mrb[0].mxu0 %v143
    %v1435 = vpop.f32.mrb[0].mxu0
    %v1436 = vadd.f32 %v1395, %v1435
    %v1437 = vpop.f32.mrb[0].mxu0
    %v1438 = vadd.f32 %v1397, %v1437
    %v1439 = vpop.f32.mrb[0].mxu0
    %v1440 = vpop.f32.mrb[0].mxu0
    %1441 = vdwg.mxu0
    %1442 = vmatprep.subr.bf16.mxu0 %v938
    %1443 = vmatpush1.bf16.msra.mxu0 %v937
    %1444 = vmatprep.subr.bf16.mxu0 %v942
    %1445 = vmatpush1.bf16.msra.mxu0 %v941
    %1446 = vmatprep.subr.bf16.mxu0 %v946
    %1447 = vmatpush1.bf16.msra.mxu0 %v945
    %1448 = vmatprep.subr.bf16.mxu0 %v950
    %1449 = vmatpush1.bf16.msra.mxu0 %v949
    %1450 = vmatprep.subr.bf16.mxu0 %v954
    %1451 = vmatpush1.bf16.msra.mxu0 %v953
    %1452 = vmatprep.subr.bf16.mxu0 %v958
    %1453 = vmatpush1.bf16.msra.mxu0 %v957
    %1454 = vmatprep.subr.bf16.mxu0 %v962
    %1455 = vmatpush1.bf16.msra.mxu0 %v961
    %1456 = vmatprep.subr.bf16.mxu0 %v966
    %1457 = vmatpush1.bf16.msra.mxu0 %v965
    %1458 = vmatprep.subr.bf16.mxu0 %v970
    %1459 = vmatpush1.bf16.msra.mxu0 %v969
    %1460 = vmatprep.subr.bf16.mxu0 %v974
    %1461 = vmatpush1.bf16.msra.mxu0 %v973
    %1462 = vmatprep.subr.bf16.mxu0 %v978
    %1463 = vmatpush1.bf16.msra.mxu0 %v977
    %1464 = vmatprep.subr.bf16.mxu0 %v982
    %1465 = vmatpush1.bf16.msra.mxu0 %v981
    %1466 = vmatprep.subr.bf16.mxu0 %v986
    %1467 = vmatpush1.bf16.msra.mxu0 %v985
    %1468 = vmatprep.subr.bf16.mxu0 %v990
    %1469 = vmatpush1.bf16.msra.mxu0 %v989
    %1470 = vmatprep.subr.bf16.mxu0 %v994
    %1471 = vmatpush1.bf16.msra.mxu0 %v993
    %1472 = vmatprep.subr.bf16.mxu0 %v998
    %1473 = vmatpush1.bf16.msra.mxu0 %v997
    %1474 = vmatprep.mubr.bf16.mxu0 %v140
    %1475 = vmatmul.mubr.bf16.gmra.mrb[0].mxu0 %v139
    %v1476 = vpop.f32.mrb[0].mxu0
    %v1477 = vadd.f32 %v350, %v1476
    %v1478 = vpop.f32.mrb[0].mxu0
    %v1479 = vadd.f32 %v354, %v1478
    %v1480 = vpop.f32.mrb[0].mxu0
    %v1481 = vpop.f32.mrb[0].mxu0
    %1482 = vdwg.mxu0
    %1483 = vmatprep.subr.bf16.mxu0 %v1002
    %1484 = vmatpush1.bf16.msra.mxu0 %v1001
    %1485 = vmatprep.subr.bf16.mxu0 %v1006
    %1486 = vmatpush1.bf16.msra.mxu0 %v1005
    %1487 = vmatprep.subr.bf16.mxu0 %v1010
    %1488 = vmatpush1.bf16.msra.mxu0 %v1009
    %1489 = vmatprep.subr.bf16.mxu0 %v1014
    %1490 = vmatpush1.bf16.msra.mxu0 %v1013
    %1491 = vmatprep.subr.bf16.mxu0 %v1018
    %1492 = vmatpush1.bf16.msra.mxu0 %v1017
    %1493 = vmatprep.subr.bf16.mxu0 %v1022
    %1494 = vmatpush1.bf16.msra.mxu0 %v1021
    %1495 = vmatprep.subr.bf16.mxu0 %v1026
    %1496 = vmatpush1.bf16.msra.mxu0 %v1025
    %1497 = vmatprep.subr.bf16.mxu0 %v1030
    %1498 = vmatpush1.bf16.msra.mxu0 %v1029
    %1499 = vmatprep.subr.bf16.mxu0 %v1034
    %1500 = vmatpush1.bf16.msra.mxu0 %v1033
    %1501 = vmatprep.subr.bf16.mxu0 %v1038
    %1502 = vmatpush1.bf16.msra.mxu0 %v1037
    %1503 = vmatprep.subr.bf16.mxu0 %v1042
    %1504 = vmatpush1.bf16.msra.mxu0 %v1041
    %1505 = vmatprep.subr.bf16.mxu0 %v1046
    %1506 = vmatpush1.bf16.msra.mxu0 %v1045
    %1507 = vmatprep.subr.bf16.mxu0 %v1050
    %1508 = vmatpush1.bf16.msra.mxu0 %v1049
    %1509 = vmatprep.subr.bf16.mxu0 %v1054
    %1510 = vmatpush1.bf16.msra.mxu0 %v1053
    %1511 = vmatprep.subr.bf16.mxu0 %v1058
    %1512 = vmatpush1.bf16.msra.mxu0 %v1057
    %1513 = vmatprep.subr.bf16.mxu0 %v1062
    %1514 = vmatpush1.bf16.msra.mxu0 %v1061
    %1515 = vmatprep.mubr.bf16.mxu0 %v142
    %1516 = vmatmul.mubr.bf16.gmra.mrb[0].mxu0 %v141
    %v1517 = vpop.f32.mrb[0].mxu0
    %v1518 = vadd.f32 %v1477, %v1517
    %v1519 = vpop.f32.mrb[0].mxu0
    %v1520 = vadd.f32 %v1479, %v1519
    %v1521 = vpop.f32.mrb[0].mxu0
    %v1522 = vpop.f32.mrb[0].mxu0
    %1523 = vdwg.mxu0
    %1524 = vmatprep.subr.bf16.mxu0 %v1066
    %1525 = vmatpush1.bf16.msra.mxu0 %v1065
    %1526 = vmatprep.subr.bf16.mxu0 %v1070
    %1527 = vmatpush1.bf16.msra.mxu0 %v1069
    %1528 = vmatprep.subr.bf16.mxu0 %v1074
    %1529 = vmatpush1.bf16.msra.mxu0 %v1073
    %1530 = vmatprep.subr.bf16.mxu0 %v1078
    %1531 = vmatpush1.bf16.msra.mxu0 %v1077
    %1532 = vmatprep.subr.bf16.mxu0 %v1082
    %1533 = vmatpush1.bf16.msra.mxu0 %v1081
    %1534 = vmatprep.subr.bf16.mxu0 %v1086
    %1535 = vmatpush1.bf16.msra.mxu0 %v1085
    %1536 = vmatprep.subr.bf16.mxu0 %v1090
    %1537 = vmatpush1.bf16.msra.mxu0 %v1089
    %1538 = vmatprep.subr.bf16.mxu0 %v1094
    %1539 = vmatpush1.bf16.msra.mxu0 %v1093
    %1540 = vmatprep.subr.bf16.mxu0 %v1098
    %1541 = vmatpush1.bf16.msra.mxu0 %v1097
    %1542 = vmatprep.subr.bf16.mxu0 %v1102
    %1543 = vmatpush1.bf16.msra.mxu0 %v1101
    %1544 = vmatprep.subr.bf16.mxu0 %v1106
    %1545 = vmatpush1.bf16.msra.mxu0 %v1105
    %1546 = vmatprep.subr.bf16.mxu0 %v1110
    %1547 = vmatpush1.bf16.msra.mxu0 %v1109
    %1548 = vmatprep.subr.bf16.mxu0 %v1114
    %1549 = vmatpush1.bf16.msra.mxu0 %v1113
    %1550 = vmatprep.subr.bf16.mxu0 %v1118
    %1551 = vmatpush1.bf16.msra.mxu0 %v1117
    %1552 = vmatprep.subr.bf16.mxu0 %v1122
    %1553 = vmatpush1.bf16.msra.mxu0 %v1121
    %1554 = vmatprep.subr.bf16.mxu0 %v1126
    %1555 = vmatpush1.bf16.msra.mxu0 %v1125
    %1556 = vmatprep.mubr.bf16.mxu0 %v144
    %1557 = vmatmul.mubr.bf16.gmra.mrb[0].mxu0 %v143
    %v1558 = vpop.f32.mrb[0].mxu0
    %v1559 = vadd.f32 %v1518, %v1558
    %v1560 = vpop.f32.mrb[0].mxu0
    %v1561 = vadd.f32 %v1520, %v1560
    %v1562 = vpop.f32.mrb[0].mxu0
    %v1563 = vpop.f32.mrb[0].mxu0
    %1564 = vdwg.mxu0
    %v1565 = vmax.f32 %v1436, 0.0
    %v1566 = vmax.f32 %v1438, 0.0
    %v1567 = vmax.f32 %v1559, 0.0
    %v1568 = vmax.f32 %v1561, 0.0
    %v1569 = vpack.c.bf16 %v1565, %v1565
    %v1570 = vpack.c.bf16 %v1566, %v1566
    %v1571 = vpack.c.bf16 %v1567, %v1567
    %v1572 = vpack.c.bf16 %v1568, %v1568
    %v1573 = vunpack.c.l.bf16 %v1569
    %v1574 = vunpack.c.l.bf16 %v1570
    %v1575 = vunpack.c.l.bf16 %v1571
    %v1576 = vunpack.c.l.bf16 %v1572
    %v1577 = vld [vmem:[#allocation7] sm:$0xf]
    %v1578 = vld [vmem:[#allocation7 + $0x4] sm:$0xf]
    %v1579 = vld [vmem:[#allocation7 + $0x8] sm:$0xf]
    %v1580 = vld [vmem:[#allocation7 + $0xc] sm:$0xf]
    %v1581 = vld [vmem:[#allocation7 + $0x10] sm:$0xf]
    %v1582 = vld [vmem:[#allocation7 + $0x14] sm:$0xf]
    %v1583 = vld [vmem:[#allocation7 + $0x18] sm:$0xf]
    %v1584 = vld [vmem:[#allocation7 + $0x1c] sm:$0xf]
    %v1585 = vld [vmem:[#allocation7 + $0x20] sm:$0xf]
    %v1586 = vld [vmem:[#allocation7 + $0x24] sm:$0xf]
    %v1587 = vld [vmem:[#allocation7 + $0x28] sm:$0xf]
    %v1588 = vld [vmem:[#allocation7 + $0x2c] sm:$0xf]
    %v1589 = vld [vmem:[#allocation7 + $0x30] sm:$0xf]
    %v1590 = vld [vmem:[#allocation7 + $0x34] sm:$0xf]
    %v1591 = vld [vmem:[#allocation7 + $0x38] sm:$0xf]
    %v1592 = vld [vmem:[#allocation7 + $0x3c] sm:$0xf]
    %v1593 = vld [vmem:[#allocation7 + $0x40] sm:$0xf]
    %v1594 = vld [vmem:[#allocation7 + $0x44] sm:$0xf]
    %v1595 = vld [vmem:[#allocation7 + $0x48] sm:$0xf]
    %v1596 = vld [vmem:[#allocation7 + $0x4c] sm:$0xf]
    %v1597 = vld [vmem:[#allocation7 + $0x50] sm:$0xf]
    %v1598 = vld [vmem:[#allocation7 + $0x54] sm:$0xf]
    %v1599 = vld [vmem:[#allocation7 + $0x58] sm:$0xf]
    %v1600 = vld [vmem:[#allocation7 + $0x5c] sm:$0xf]
    %v1601 = vld [vmem:[#allocation7 + $0x60] sm:$0xf]
    %v1602 = vld [vmem:[#allocation7 + $0x64] sm:$0xf]
    %v1603 = vld [vmem:[#allocation7 + $0x68] sm:$0xf]
    %v1604 = vld [vmem:[#allocation7 + $0x6c] sm:$0xf]
    %v1605 = vld [vmem:[#allocation7 + $0x70] sm:$0xf]
    %v1606 = vld [vmem:[#allocation7 + $0x74] sm:$0xf]
    %v1607 = vld [vmem:[#allocation7 + $0x78] sm:$0xf]
    %v1608 = vld [vmem:[#allocation7 + $0x7c] sm:$0xf]
    %v1609 = vld [vmem:[#allocation7 + $0x80] sm:$0xf]
    %v1610 = vld [vmem:[#allocation7 + $0x84] sm:$0xf]
    %v1611 = vld [vmem:[#allocation7 + $0x88] sm:$0xf]
    %v1612 = vld [vmem:[#allocation7 + $0x8c] sm:$0xf]
    %v1613 = vld [vmem:[#allocation7 + $0x90] sm:$0xf]
    %v1614 = vld [vmem:[#allocation7 + $0x94] sm:$0xf]
    %v1615 = vld [vmem:[#allocation7 + $0x98] sm:$0xf]
    %v1616 = vld [vmem:[#allocation7 + $0x9c] sm:$0xf]
    %v1617 = vld [vmem:[#allocation7 + $0xa0] sm:$0xf]
    %v1618 = vld [vmem:[#allocation7 + $0xa4] sm:$0xf]
    %v1619 = vld [vmem:[#allocation7 + $0xa8] sm:$0xf]
    %v1620 = vld [vmem:[#allocation7 + $0xac] sm:$0xf]
    %v1621 = vld [vmem:[#allocation7 + $0xb0] sm:$0xf]
    %v1622 = vld [vmem:[#allocation7 + $0xb4] sm:$0xf]
    %v1623 = vld [vmem:[#allocation7 + $0xb8] sm:$0xf]
    %v1624 = vld [vmem:[#allocation7 + $0xbc] sm:$0xf]
    %v1625 = vld [vmem:[#allocation7 + $0xc0] sm:$0xf]
    %v1626 = vld [vmem:[#allocation7 + $0xc4] sm:$0xf]
    %v1627 = vld [vmem:[#allocation7 + $0xc8] sm:$0xf]
    %v1628 = vld [vmem:[#allocation7 + $0xcc] sm:$0xf]
    %v1629 = vld [vmem:[#allocation7 + $0xd0] sm:$0xf]
    %v1630 = vld [vmem:[#allocation7 + $0xd4] sm:$0xf]
    %v1631 = vld [vmem:[#allocation7 + $0xd8] sm:$0xf]
    %v1632 = vld [vmem:[#allocation7 + $0xdc] sm:$0xf]
    %v1633 = vld [vmem:[#allocation7 + $0xe0] sm:$0xf]
    %v1634 = vld [vmem:[#allocation7 + $0xe4] sm:$0xf]
    %v1635 = vld [vmem:[#allocation7 + $0xe8] sm:$0xf]
    %v1636 = vld [vmem:[#allocation7 + $0xec] sm:$0xf]
    %v1637 = vld [vmem:[#allocation7 + $0xf0] sm:$0xf]
    %v1638 = vld [vmem:[#allocation7 + $0xf4] sm:$0xf]
    %v1639 = vld [vmem:[#allocation7 + $0xf8] sm:$0xf]
    %v1640 = vld [vmem:[#allocation7 + $0xfc] sm:$0xf]
    %v1705 = vunpack.c.l.b16 %v1577
    %v1706 = vunpack.c.l.b16 %v1578
    %v1707 = vunpack.c.l.b16 %v1579
    %v1708 = vunpack.c.l.b16 %v1580
    %v1709 = vunpack.c.l.b16 %v1581
    %v1710 = vunpack.c.l.b16 %v1582
    %v1711 = vunpack.c.l.b16 %v1583
    %v1712 = vunpack.c.l.b16 %v1584
    %v1713 = vunpack.c.l.b16 %v1585
    %v1714 = vunpack.c.l.b16 %v1586
    %v1715 = vunpack.c.l.b16 %v1587
    %v1716 = vunpack.c.l.b16 %v1588
    %v1717 = vunpack.c.l.b16 %v1589
    %v1718 = vunpack.c.l.b16 %v1590
    %v1719 = vunpack.c.l.b16 %v1591
    %v1720 = vunpack.c.l.b16 %v1592
    %v1721 = vunpack.c.l.b16 %v1593
    %v1722 = vunpack.c.l.b16 %v1594
    %v1723 = vunpack.c.l.b16 %v1595
    %v1724 = vunpack.c.l.b16 %v1596
    %v1725 = vunpack.c.l.b16 %v1597
    %v1726 = vunpack.c.l.b16 %v1598
    %v1727 = vunpack.c.l.b16 %v1599
    %v1728 = vunpack.c.l.b16 %v1600
    %v1729 = vunpack.c.l.b16 %v1601
    %v1730 = vunpack.c.l.b16 %v1602
    %v1731 = vunpack.c.l.b16 %v1603
    %v1732 = vunpack.c.l.b16 %v1604
    %v1733 = vunpack.c.l.b16 %v1605
    %v1734 = vunpack.c.l.b16 %v1606
    %v1735 = vunpack.c.l.b16 %v1607
    %v1736 = vunpack.c.l.b16 %v1608
    %v1737 = vunpack.c.l.b16 %v1609
    %v1738 = vunpack.c.l.b16 %v1610
    %v1739 = vunpack.c.l.b16 %v1611
    %v1740 = vunpack.c.l.b16 %v1612
    %v1741 = vunpack.c.l.b16 %v1613
    %v1742 = vunpack.c.l.b16 %v1614
    %v1743 = vunpack.c.l.b16 %v1615
    %v1744 = vunpack.c.l.b16 %v1616
    %v1745 = vunpack.c.l.b16 %v1617
    %v1746 = vunpack.c.l.b16 %v1618
    %v1747 = vunpack.c.l.b16 %v1619
    %v1748 = vunpack.c.l.b16 %v1620
    %v1749 = vunpack.c.l.b16 %v1621
    %v1750 = vunpack.c.l.b16 %v1622
    %v1751 = vunpack.c.l.b16 %v1623
    %v1752 = vunpack.c.l.b16 %v1624
    %v1753 = vunpack.c.l.b16 %v1625
    %v1754 = vunpack.c.l.b16 %v1626
    %v1755 = vunpack.c.l.b16 %v1627
    %v1756 = vunpack.c.l.b16 %v1628
    %v1757 = vunpack.c.l.b16 %v1629
    %v1758 = vunpack.c.l.b16 %v1630
    %v1759 = vunpack.c.l.b16 %v1631
    %v1760 = vunpack.c.l.b16 %v1632
    %v1761 = vunpack.c.l.b16 %v1633
    %v1762 = vunpack.c.l.b16 %v1634
    %v1763 = vunpack.c.l.b16 %v1635
    %v1764 = vunpack.c.l.b16 %v1636
    %v1765 = vunpack.c.l.b16 %v1637
    %v1766 = vunpack.c.l.b16 %v1638
    %v1767 = vunpack.c.l.b16 %v1639
    %v1768 = vunpack.c.l.b16 %v1640
    %v1769 = vpack.c.b16 %v1706, %v1705
    %v1770 = vpack.c.b16 %v1708, %v1707
    %v1771 = vpack.c.b16 %v1710, %v1709
    %v1772 = vpack.c.b16 %v1712, %v1711
    %v1773 = vpack.c.b16 %v1714, %v1713
    %v1774 = vpack.c.b16 %v1716, %v1715
    %v1775 = vpack.c.b16 %v1718, %v1717
    %v1776 = vpack.c.b16 %v1720, %v1719
    %v1777 = vpack.c.b16 %v1722, %v1721
    %v1778 = vpack.c.b16 %v1724, %v1723
    %v1779 = vpack.c.b16 %v1726, %v1725
    %v1780 = vpack.c.b16 %v1728, %v1727
    %v1781 = vpack.c.b16 %v1730, %v1729
    %v1782 = vpack.c.b16 %v1732, %v1731
    %v1783 = vpack.c.b16 %v1734, %v1733
    %v1784 = vpack.c.b16 %v1736, %v1735
    %v1785 = vpack.c.b16 %v1738, %v1737
    %v1786 = vpack.c.b16 %v1740, %v1739
    %v1787 = vpack.c.b16 %v1742, %v1741
    %v1788 = vpack.c.b16 %v1744, %v1743
    %v1789 = vpack.c.b16 %v1746, %v1745
    %v1790 = vpack.c.b16 %v1748, %v1747
    %v1791 = vpack.c.b16 %v1750, %v1749
    %v1792 = vpack.c.b16 %v1752, %v1751
    %v1793 = vpack.c.b16 %v1754, %v1753
    %v1794 = vpack.c.b16 %v1756, %v1755
    %v1795 = vpack.c.b16 %v1758, %v1757
    %v1796 = vpack.c.b16 %v1760, %v1759
    %v1797 = vpack.c.b16 %v1762, %v1761
    %v1798 = vpack.c.b16 %v1764, %v1763
    %v1799 = vpack.c.b16 %v1766, %v1765
    %v1800 = vpack.c.b16 %v1768, %v1767
    %1833 = vmatprep.subr.bf16.mxu0 0
    %1834 = vmatpush1.bf16.msra.mxu0 %v1769
    %1835 = vmatprep.subr.bf16.mxu0 0
    %1836 = vmatpush1.bf16.msra.mxu0 %v1770
    %1837 = vmatprep.subr.bf16.mxu0 0
    %1838 = vmatpush1.bf16.msra.mxu0 %v1771
    %1839 = vmatprep.subr.bf16.mxu0 0
    %1840 = vmatpush1.bf16.msra.mxu0 %v1772
    %1841 = vmatprep.subr.bf16.mxu0 0
    %1842 = vmatpush1.bf16.msra.mxu0 %v1773
    %1843 = vmatprep.subr.bf16.mxu0 0
    %1844 = vmatpush1.bf16.msra.mxu0 %v1774
    %1845 = vmatprep.subr.bf16.mxu0 0
    %1846 = vmatpush1.bf16.msra.mxu0 %v1775
    %1847 = vmatprep.subr.bf16.mxu0 0
    %1848 = vmatpush1.bf16.msra.mxu0 %v1776
    %1849 = vmatprep.subr.bf16.mxu0 0
    %1850 = vmatpush1.bf16.msra.mxu0 %v1777
    %1851 = vmatprep.subr.bf16.mxu0 0
    %1852 = vmatpush1.bf16.msra.mxu0 %v1778
    %1853 = vmatprep.subr.bf16.mxu0 0
    %1854 = vmatpush1.bf16.msra.mxu0 %v1779
    %1855 = vmatprep.subr.bf16.mxu0 0
    %1856 = vmatpush1.bf16.msra.mxu0 %v1780
    %1857 = vmatprep.subr.bf16.mxu0 0
    %1858 = vmatpush1.bf16.msra.mxu0 %v1781
    %1859 = vmatprep.subr.bf16.mxu0 0
    %1860 = vmatpush1.bf16.msra.mxu0 %v1782
    %1861 = vmatprep.subr.bf16.mxu0 0
    %1862 = vmatpush1.bf16.msra.mxu0 %v1783
    %1863 = vmatprep.subr.bf16.mxu0 0
    %1864 = vmatpush1.bf16.msra.mxu0 %v1784
    %1865 = vmatprep.mubr.bf16.mxu0 %v1570
    %1866 = vmatmul.mubr.bf16.gmra.mrb[0].mxu0 %v1569
    %v1867 = vpop.f32.mrb[0].mxu0
    %v1868 = vadd.f32 0.0, %v1867
    %v1869 = vpop.f32.mrb[0].mxu0
    %v1870 = vpop.f32.mrb[0].mxu0
    %v1871 = vpop.f32.mrb[0].mxu0
    %1872 = vdwg.mxu0
    %1873 = vmatprep.subr.bf16.mxu0 0
    %1874 = vmatpush1.bf16.msra.mxu0 %v1785
    %1875 = vmatprep.subr.bf16.mxu0 0
    %1876 = vmatpush1.bf16.msra.mxu0 %v1786
    %1877 = vmatprep.subr.bf16.mxu0 0
    %1878 = vmatpush1.bf16.msra.mxu0 %v1787
    %1879 = vmatprep.subr.bf16.mxu0 0
    %1880 = vmatpush1.bf16.msra.mxu0 %v1788
    %1881 = vmatprep.subr.bf16.mxu0 0
    %1882 = vmatpush1.bf16.msra.mxu0 %v1789
    %1883 = vmatprep.subr.bf16.mxu0 0
    %1884 = vmatpush1.bf16.msra.mxu0 %v1790
    %1885 = vmatprep.subr.bf16.mxu0 0
    %1886 = vmatpush1.bf16.msra.mxu0 %v1791
    %1887 = vmatprep.subr.bf16.mxu0 0
    %1888 = vmatpush1.bf16.msra.mxu0 %v1792
    %1889 = vmatprep.subr.bf16.mxu0 0
    %1890 = vmatpush1.bf16.msra.mxu0 %v1793
    %1891 = vmatprep.subr.bf16.mxu0 0
    %1892 = vmatpush1.bf16.msra.mxu0 %v1794
    %1893 = vmatprep.subr.bf16.mxu0 0
    %1894 = vmatpush1.bf16.msra.mxu0 %v1795
    %1895 = vmatprep.subr.bf16.mxu0 0
    %1896 = vmatpush1.bf16.msra.mxu0 %v1796
    %1897 = vmatprep.subr.bf16.mxu0 0
    %1898 = vmatpush1.bf16.msra.mxu0 %v1797
    %1899 = vmatprep.subr.bf16.mxu0 0
    %1900 = vmatpush1.bf16.msra.mxu0 %v1798
    %1901 = vmatprep.subr.bf16.mxu0 0
    %1902 = vmatpush1.bf16.msra.mxu0 %v1799
    %1903 = vmatprep.subr.bf16.mxu0 0
    %1904 = vmatpush1.bf16.msra.mxu0 %v1800
    %1905 = vmatprep.mubr.bf16.mxu0 %v1572
    %1906 = vmatmul.mubr.bf16.gmra.mrb[0].mxu0 %v1571
    %v1907 = vpop.f32.mrb[0].mxu0
    %v1908 = vadd.f32 %v1868, %v1907
    %v1909 = vpop.f32.mrb[0].mxu0
    %v1910 = vpop.f32.mrb[0].mxu0
    %v1911 = vpop.f32.mrb[0].mxu0
    %1912 = vdwg.mxu0
    %v1913 = vmul.f32 %v1573, %v1573
    %v1914 = vmul.f32 %v1574, %v1574
    %v1915 = vmul.f32 %v1575, %v1575
    %v1916 = vmul.f32 %v1576, %v1576
    %v1917 = vadd.f32 %v1913, %v1914
    %v1918 = vadd.f32 %v1917, %v1915
    %v1919 = vadd.f32 %v1918, %v1916
    %1920 = vadd.xlane.f32.xlu0 %v1919
    %v1921 = vpop.xlane.xlu0 %1920
    %v1922 = vmul.f32 %v1908, 2.0
    %v1923 = vsub.f32 %v1921, %v1922
    %v1924 = vld [vmem:[%s4] sm:$0x1]
    %v1926 = vlaneseq
    %v1927 = vshrl.u32 %v1926, 7
    %v1928 = vsub.s32 0, %v1927
    %v1929 = vrot.slane %v1924, %v1928
    %v1931 = vadd.f32 %v1923, %v1929
    %v1932 = vmax.f32 %v1931, 0.0
    %v1933 = vadd.f32 %v1932, 1e-12
    %v1934 = vlaneseq
    %v1935 = vand.u32 %v1934, 127
    %vm1936 = vcmp.lt.s32.totalorder %v1935, 10
    %v1937 = vrcp.pop %v1933
    %v1938 = vsel %vm1936, %v1937, 0.0
    %1939 = vadd.xlane.f32.xlu0 %v1938
    %v1940 = vpop.xlane.xlu0 %1939
    %v1941 = vrcp.pop %v1940
    %v1942 = vmul.f32 %v1938, %v1941
    %1943 = vst [vmem:[#allocation8] sm:$0xff] %v1942
    // Predicated region
    $region34: #{tpu_custom_call.1} parent=1 // pred_check
      _
    $region35: #{tpu_custom_call.1} parent=1 // pred_check_branch
      %1945 = sbr.rel (0) target = $region37
    $region36: #{tpu_custom_call.1} parent=1 // pred_region
      %s1947 = ssub.s32 128, 32
      %1948 = vsyncadd [#allocation4], %s1947
      %s1949 = sshll.u32 [#allocation8], 4
      %s1950 = int_to_ptr.vmem [resolvable:$true] %s1949
      %1955 = dma.vmem_to_hbm [thread:$0]  %s1950, 32, %s5, [#allocation4], 32, 32, 2
    $region37: #{tpu_custom_call.1} parent=1 // pred_fallthru
      _
    // Predicated region
    $region38: #{tpu_custom_call.1} parent=1 // pred_check
      _
    $region39: #{tpu_custom_call.1} parent=1 // pred_check_branch
      %1957 = sbr.rel (0) target = $region41
    $region40: #{tpu_custom_call.1} parent=1 // pred_region
      %1958 = dma.done [#allocation4], 128
    $region41: #{tpu_custom_call.1} parent=1 // pred_fallthru
      _
    %1959 = vsyncpa [#allocation3], 1
    %1960 = vsyncpa [#allocation6], 1
    %1961 = vsyncpa [#allocation4], 1

</llo_original>
